<compile_context>
chip_gen: v7x
topology: tpu7x:2x2x1
jax: 0.10.0
libtpu: 0.0.40
codegen_flags: <defaults>
</compile_context>

<pallas_src>
import jax
import jax.numpy as jnp
from jax.experimental import pallas as pl
from jax.experimental.pallas import tpu as pltpu

KS = 3  # kernel size (3x3, stride=1, padding=1)

# Per-generation VMEM budget: v7x has 64 MiB per TensorCore, v5e/v6e have 128 MiB.
try:
    _VMEM_CAP = int(pltpu.get_tpu_info().vmem_capacity_bytes)
except Exception:  # conservative (v7x-safe) default if the query is unavailable
    _VMEM_CAP = 64 * 1024 * 1024
_VMEM_LIMIT = min((_VMEM_CAP * 3) // 4, 96 * 1024 * 1024)


def _pick_th(H, W, Cin, Cout, N, target_m=2048, min_m=256):
    """Row-tile height: largest divisor of H whose working set fits the VMEM
    budget and keeps M = TH*W <= target_m; shrink (but not below min_m rows)
    if that leaves fewer than 4 grid steps (v7x has 2 TensorCores that each
    want >=2 steps for pipelining)."""
    budget = (_VMEM_LIMIT * 3) // 4  # headroom for Mosaic internal scratch

    def fits(th):
        m = th * W
        # Keep the flat (TH*W, Cout) output block sublane-aligned.
        # TODO(synk): odd W*TH would need the 3-D (TH, W, Cout) output block.
        if m % 8 != 0:
            return False
        vmem = (2 * (th + 2) * (W + 2) * Cin * 2        # double-buffered bf16 input tile
                + 2 * m * Cout * 2                      # double-buffered bf16 output tile
                + m * KS * KS * Cin * 2                 # im2col patch (bf16)
                + m * Cout * 4                          # f32 accumulator
                + KS * KS * Cin * Cout * 2 + Cout * 4)  # resident weights + bias
        return vmem <= budget

    divs = [d for d in range(H, 0, -1) if H % d == 0]
    ok = [d for d in divs if fits(d)] or [divs[-1]]
    th = next((d for d in ok if d * W <= target_m), ok[-1])
    while N * (H // th) < 4:
        smaller = [d for d in ok if d < th and d * W >= min_m]
        if not smaller:
            break
        th = max(smaller)
    return th


def conv_bn_relu_kernel(x_ref, w_ref, b_ref, o_ref):
    # x_ref: (TH+2, W+2, Cin)   bf16 element-indexed halo window of the padded input
    # w_ref: (KS*KS*Cin, Cout)  bf16, BN scale folded in, taps ordered (kh, kw, cin)
    # b_ref: (1, Cout)          f32, folded BN bias
    # o_ref: (TH*W, Cout)       bf16, flat lane-dim-=Cout output slab
    th2, wp2, cin = x_ref.shape
    th, w = th2 - (KS - 1), wp2 - (KS - 1)
    x = x_ref[...]  # load the halo tile once

    # im2col: 9 shifted views -> (TH*W, 9*Cin) slab; one fat MXU matmul, f32 acc.
    cols = []
    for kh in range(KS):
        for kw in range(KS):
            cols.append(x[kh:kh + th, kw:kw + w, :].reshape(th * w, cin))
    patch = jnp.concatenate(cols, axis=-1)
    acc = jnp.dot(patch, w_ref[...], preferred_element_type=jnp.float32)

    # Fused BN bias + ReLU epilogue (scale already folded into the weights).
    o_ref[...] = jnp.maximum(acc + b_ref[...], 0.0).astype(o_ref.dtype)


@jax.jit
def conv_bn_relu(x_nchw, weight_oihw, gamma, beta, running_mean, running_var,
                 eps=1e-5):
    """Fused Conv2d(3x3, s1, p1, bias=False) + BatchNorm2d(eval) + ReLU.

    x_nchw: (N, Cin, H, W) float32.  Returns (N, Cout, H, W) float32."""
    N, Cin, H, W = x_nchw.shape
    Cout = weight_oihw.shape[0]

    # Lane-dense im2col only when the extra input HBM traffic is bounded (<2x).
    cin_pad = ((Cin + 127) // 128) * 128 if Cin >= 64 else Cin

    TH = _pick_th(H, W, cin_pad, Cout, N)
    nH = H // TH

    # Fold eval-mode BatchNorm into per-output-channel scale/bias; scale goes
    # straight into the conv weights.
    scale = gamma / jnp.sqrt(running_var + eps)
    bias = beta - running_mean * scale

    # OIHW -> (kh, kw, cin, cout) -> (KS*KS*cin_pad, Cout), bf16, BN-scaled.
    w_scaled = weight_oihw * scale[:, None, None, None]
    w_hwio = jnp.transpose(w_scaled, (2, 3, 1, 0))                 # (KS, KS, Cin, Cout)
    w_hwio = jnp.pad(w_hwio, ((0, 0), (0, 0), (0, cin_pad - Cin), (0, 0)))
    w_flat = w_hwio.reshape(KS * KS * cin_pad, Cout).astype(jnp.bfloat16)
    bias2d = bias.reshape(1, Cout).astype(jnp.float32)

    # NCHW -> NHWC bf16, zero spatial pad by 1, fold N into the row axis so the
    # kernel reads overlapping (TH+2)-row halo windows straight out of this
    # array (element-indexed BlockSpec) -- no duplicated halo copies in HBM.
    x_nhwc = jnp.transpose(x_nchw, (0, 2, 3, 1)).astype(jnp.bfloat16)
    x_pad = jnp.pad(x_nhwc, ((0, 0), (1, 1), (1, 1), (0, cin_pad - Cin)))
    x_rows = x_pad.reshape(N * (H + 2), W + 2, cin_pad)

    out_flat = pl.pallas_call(
        conv_bn_relu_kernel,
        out_shape=jax.ShapeDtypeStruct((N * nH, TH * W, Cout), jnp.bfloat16),
        grid=(N, nH),
        in_specs=[
            # Overlapping halo window: element offsets n*(H+2)+h*TH, TH+2 rows.
            pl.BlockSpec(
                (pl.Element(TH + 2), pl.Element(W + 2), pl.Element(cin_pad)),
                lambda n, h: (n * (H + 2) + h * TH, 0, 0)),
            # Folded weights / bias stay VMEM-resident (constant block index).
            pl.BlockSpec((KS * KS * cin_pad, Cout), lambda n, h: (0, 0)),
            pl.BlockSpec((1, Cout), lambda n, h: (0, 0)),
        ],
        out_specs=pl.BlockSpec((None, TH * W, Cout),
                               lambda n, h: (n * nH + h, 0, 0)),
        compiler_params=pltpu.CompilerParams(
            dimension_semantics=("parallel", "parallel"),
            vmem_limit_bytes=_VMEM_LIMIT,
        ),
    )(x_rows, w_flat, bias2d)

    # (N*nH, TH*W, Cout) -> (N, H, W, Cout) -> NCHW float32.
    out_nhwc = out_flat.reshape(N, H, W, Cout)
    return jnp.transpose(out_nhwc, (0, 3, 1, 2)).astype(jnp.float32)


def reference_conv_bn_relu(x_nchw, weight_oihw, gamma, beta, mean, var,
                           eps=1e-5):
    y = jax.lax.conv_general_dilated(
        x_nchw, weight_oihw, window_strides=(1, 1), padding=((1, 1), (1, 1)),
        dimension_numbers=("NCHW", "OIHW", "NCHW"))
    scale = gamma / jnp.sqrt(var + eps)
    bias = beta - mean * scale
    return jnp.maximum(y * scale[None, :, None, None] + bias[None, :, None, None], 0.0)


if __name__ == "__main__":
    key = jax.random.PRNGKey(0)
    N, Cin, Cout, H, W = 2, 4, 8, 16, 16

    kx, kw = jax.random.split(key)
    x = jax.random.normal(kx, (N, Cin, H, W), dtype=jnp.float32)

    # Kaiming normal with a=1: gain = sqrt(2/(1+a^2)) = 1, std = 1/sqrt(fan_in).
    fan_in = Cin * KS * KS
    w = jax.random.normal(kw, (Cout, Cin, KS, KS), dtype=jnp.float32) / jnp.sqrt(
        jnp.float32(fan_in))

    # BatchNorm2d default params / running stats (eval mode).
    gamma = jnp.ones((Cout,), jnp.float32)
    beta = jnp.zeros((Cout,), jnp.float32)
    running_mean = jnp.zeros((Cout,), jnp.float32)
    running_var = jnp.ones((Cout,), jnp.float32)

    out = jax.block_until_ready(
        conv_bn_relu(x, w, gamma, beta, running_mean, running_var))
    assert out.shape == (N, Cout, H, W)

    # 1) Strict check against a reference using the same bf16-quantized inputs /
    #    BN-folded weights (f32 accumulation) and the same bf16 output rounding.
    eps = 1e-5
    scale = gamma / jnp.sqrt(running_var + eps)
    bias = beta - running_mean * scale
    w_folded = (w * scale[:, None, None, None]).astype(jnp.bfloat16).astype(jnp.float32)
    x_bf = x.astype(jnp.bfloat16).astype(jnp.float32)
    ref_bf = jax.lax.conv_general_dilated(
        x_bf, w_folded, window_strides=(1, 1), padding=((1, 1), (1, 1)),
        dimension_numbers=("NCHW", "OIHW", "NCHW"))
    ref_bf = jnp.maximum(ref_bf + bias[None, :, None, None], 0.0)
    ref_bf = ref_bf.astype(jnp.bfloat16).astype(jnp.float32)
    assert jnp.allclose(out, ref_bf, atol=2e-2, rtol=2e-2), "strict bf16 check failed"

    # 2) Loose check against the full-fp32 reference (bounds bf16 matmul error).
    ref = reference_conv_bn_relu(x, w, gamma, beta, running_mean, running_var)
    assert jnp.allclose(out, ref, atol=1e-1, rtol=1e-1), "loose f32 check failed"

    print("KERNEL_OK")
</pallas_src>

<mosaic_0001>
module attributes {stable_mosaic.version = 11 : i64} {
  func.func @conv_bn_relu_kernel(%arg0: i32, %arg1: i32, %arg2: memref<18x18x4xbf16, #tpu.memory_space<vmem>>, %arg3: memref<36x8xbf16, #tpu.memory_space<vmem>>, %arg4: memref<1x8xf32, #tpu.memory_space<vmem>>, %arg5: memref<1x256x8xbf16, #tpu.memory_space<vmem>>) attributes {dimension_semantics = [#tpu.dimension_semantics<parallel>, #tpu.dimension_semantics<parallel>], iteration_bounds = array<i64: 2, 1>, scalar_prefetch = 0 : i64, scratch_operands = 0 : i64, tpu.core_type = #tpu.core_type<tc>, window_params = [{transform_indices = @transform_0, window_bounds = array<i64: 18, 18, 4>, window_kind = #tpu.element_window<[0, 0, 0], [0, 0, 0]>}, {pipeline_mode = #tpu.pipeline_mode<synchronous>, transform_indices = @transform_1, window_bounds = array<i64: 36, 8>}, {pipeline_mode = #tpu.pipeline_mode<synchronous>, transform_indices = @transform_2, window_bounds = array<i64: 1, 8>}, {transform_indices = @transform_3, window_bounds = array<i64: 1, 256, 8>}]} {
    %c0 = arith.constant 0 : index
    %c0_0 = arith.constant 0 : index
    %c0_1 = arith.constant 0 : index
    %0 = vector.load %arg2[%c0, %c0_0, %c0_1] : memref<18x18x4xbf16, #tpu.memory_space<vmem>>, vector<18x18x4xbf16>
    %1 = vector.extract_strided_slice %0 {offsets = [0, 0, 0], sizes = [16, 16, 4], strides = [1, 1, 1]} : vector<18x18x4xbf16> to vector<16x16x4xbf16>
    %2 = vector.shape_cast %1 : vector<16x16x4xbf16> to vector<256x4xbf16>
    %3 = vector.extract_strided_slice %0 {offsets = [0, 1, 0], sizes = [16, 16, 4], strides = [1, 1, 1]} : vector<18x18x4xbf16> to vector<16x16x4xbf16>
    %4 = vector.shape_cast %3 : vector<16x16x4xbf16> to vector<256x4xbf16>
    %5 = vector.extract_strided_slice %0 {offsets = [0, 2, 0], sizes = [16, 16, 4], strides = [1, 1, 1]} : vector<18x18x4xbf16> to vector<16x16x4xbf16>
    %6 = vector.shape_cast %5 : vector<16x16x4xbf16> to vector<256x4xbf16>
    %7 = vector.extract_strided_slice %0 {offsets = [1, 0, 0], sizes = [16, 16, 4], strides = [1, 1, 1]} : vector<18x18x4xbf16> to vector<16x16x4xbf16>
    %8 = vector.shape_cast %7 : vector<16x16x4xbf16> to vector<256x4xbf16>
    %9 = vector.extract_strided_slice %0 {offsets = [1, 1, 0], sizes = [16, 16, 4], strides = [1, 1, 1]} : vector<18x18x4xbf16> to vector<16x16x4xbf16>
    %10 = vector.shape_cast %9 : vector<16x16x4xbf16> to vector<256x4xbf16>
    %11 = vector.extract_strided_slice %0 {offsets = [1, 2, 0], sizes = [16, 16, 4], strides = [1, 1, 1]} : vector<18x18x4xbf16> to vector<16x16x4xbf16>
    %12 = vector.shape_cast %11 : vector<16x16x4xbf16> to vector<256x4xbf16>
    %13 = vector.extract_strided_slice %0 {offsets = [2, 0, 0], sizes = [16, 16, 4], strides = [1, 1, 1]} : vector<18x18x4xbf16> to vector<16x16x4xbf16>
    %14 = vector.shape_cast %13 : vector<16x16x4xbf16> to vector<256x4xbf16>
    %15 = vector.extract_strided_slice %0 {offsets = [2, 1, 0], sizes = [16, 16, 4], strides = [1, 1, 1]} : vector<18x18x4xbf16> to vector<16x16x4xbf16>
    %16 = vector.shape_cast %15 : vector<16x16x4xbf16> to vector<256x4xbf16>
    %17 = vector.extract_strided_slice %0 {offsets = [2, 2, 0], sizes = [16, 16, 4], strides = [1, 1, 1]} : vector<18x18x4xbf16> to vector<16x16x4xbf16>
    %18 = vector.shape_cast %17 : vector<16x16x4xbf16> to vector<256x4xbf16>
    %19 = tpu.concatenate %2, %4, %6, %8, %10, %12, %14, %16, %18 in 1 : vector<256x4xbf16>, vector<256x4xbf16>, vector<256x4xbf16>, vector<256x4xbf16>, vector<256x4xbf16>, vector<256x4xbf16>, vector<256x4xbf16>, vector<256x4xbf16>, vector<256x4xbf16> -> vector<256x36xbf16>
    %c0_2 = arith.constant 0 : index
    %c0_3 = arith.constant 0 : index
    %20 = vector.load %arg3[%c0_2, %c0_3] : memref<36x8xbf16, #tpu.memory_space<vmem>>, vector<36x8xbf16>
    %cst = arith.constant dense<0.000000e+00> : vector<256x8xf32>
    %21 = tpu.matmul %19, %20, %cst {dimension_numbers = #tpu.dot_dimension_numbers<[1], [0], [0], [1], [0, 0, 1, 1], [], []>} : vector<256x36xbf16>, vector<36x8xbf16>, vector<256x8xf32> -> vector<256x8xf32>
    %c0_4 = arith.constant 0 : index
    %c0_5 = arith.constant 0 : index
    %22 = vector.load %arg4[%c0_4, %c0_5] : memref<1x8xf32, #tpu.memory_space<vmem>>, vector<1x8xf32>
    %23 = vector.broadcast %22 : vector<1x8xf32> to vector<256x8xf32>
    %24 = arith.addf %21, %23 : vector<256x8xf32>
    %cst_6 = arith.constant 0.000000e+00 : f32
    %25 = vector.broadcast %cst_6 : f32 to vector<256x8xf32>
    %26 = arith.maximumf %24, %25 : vector<256x8xf32>
    %27 = arith.truncf %26 : vector<256x8xf32> to vector<256x8xbf16>
    %c0_7 = arith.constant 0 : index
    %c0_8 = arith.constant 0 : index
    %c0_9 = arith.constant 0 : index
    %28 = vector.load %arg5[%c0_7, %c0_8, %c0_9] : memref<1x256x8xbf16, #tpu.memory_space<vmem>>, vector<1x256x8xbf16>
    %29 = vector.shape_cast %28 : vector<1x256x8xbf16> to vector<256x8xbf16>
    %30 = vector.shape_cast %27 : vector<256x8xbf16> to vector<1x256x8xbf16>
    tpu.vector_store %arg5[%c0_7, %c0_8, %c0_9], %30 {strides = array<i32>} : memref<1x256x8xbf16, #tpu.memory_space<vmem>>, vector<1x256x8xbf16>,
    return
  }
  func.func @transform_0(%arg0: i32, %arg1: i32) -> (i32, i32, i32) {
    %c18_i32 = arith.constant 18 : i32
    %0 = arith.muli %arg0, %c18_i32 : i32
    %c16_i32 = arith.constant 16 : i32
    %1 = arith.muli %arg1, %c16_i32 : i32
    %2 = arith.addi %0, %1 : i32
    %c0_i32 = arith.constant 0 : i32
    %c0_i32_0 = arith.constant 0 : i32
    %c0_i32_1 = arith.constant 0 : i32
    return %2, %c0_i32, %c0_i32_0 : i32, i32, i32
  }
  func.func @transform_1(%arg0: i32, %arg1: i32) -> (i32, i32) {
    %c0_i32 = arith.constant 0 : i32
    %c0_i32_0 = arith.constant 0 : i32
    %c0_i32_1 = arith.constant 0 : i32
    return %c0_i32, %c0_i32_0 : i32, i32
  }
  func.func @transform_2(%arg0: i32, %arg1: i32) -> (i32, i32) {
    %c0_i32 = arith.constant 0 : i32
    %c0_i32_0 = arith.constant 0 : i32
    %c0_i32_1 = arith.constant 0 : i32
    return %c0_i32, %c0_i32_0 : i32, i32
  }
  func.func @transform_3(%arg0: i32, %arg1: i32) -> (i32, i32, i32) {
    %c1_i32 = arith.constant 1 : i32
    %0 = arith.muli %arg0, %c1_i32 : i32
    %1 = arith.addi %0, %arg1 : i32
    %c0_i32 = arith.constant 0 : i32
    %c0_i32_0 = arith.constant 0 : i32
    %c0_i32_1 = arith.constant 0 : i32
    return %1, %c0_i32, %c0_i32_0 : i32, i32, i32
  }
}

</mosaic_0001>

<llo_original>
// kernel: conv_bn_relu.1
$region0: #{conv_bn_relu.1}
  #allocation0 [shape = 'u32[]', space=smem, size = 0x4, offset = 0x4, fixed_abs, tag = 'smem constant byte address 0x4 - core index']
  #allocation1 [shape = 'u32[144,128]{1,0:T(1,128)}', space=vmem, size = 0x12000, scoped, tag = 'internal scratch']
  %s0 = inlined_call_operand.vmem [shape: bf16[36,18,4], index: 0, kind: input, shape index: {}]
  %s1 = inlined_call_operand.vmem [shape: bf16[36,8], index: 1, kind: input, shape index: {}]
  %s2 = inlined_call_operand.vmem [shape: f32[1,8], index: 2, kind: input, shape index: {}]
  %s3 = inlined_call_operand.vmem [shape: bf16[2,256,8], index: 3, kind: output, shape index: {}]
  %s4 = sld [smem:[#allocation0]]
  $region45: #{conv_bn_relu.1} parent=0
    _
  %s6 = ssub.s32 1, %s4
  %s7 = scalar_select 0, %s6, %s4
  loop: start=0, step=1, limit=4
  $region2: #{conv_bn_relu.1} parent=0 // loop_pre_header
    _
  $region3: #{conv_bn_relu.1} parent=0 // loop_header
    %s9 = sphi 0, %s13
    %p10 = scmp.ge.s32.totalorder %s9, 4
    %s16 = sphi 0, %s28
    %s17 = sphi 0, %s24
    %s18 = sphi 0, %s16
    %s19 = sphi 0, %s17
    %s20 = sphi 0, %s18
    %s21 = sphi 0, %s19
    %s45 = sphi 0, %s47
    %s48 = sphi 0, %s45
    %s49 = sphi 0, %s48
    %s65 = sphi 0, %s49
    %s69 = sphi 0, %s69
    %s71 = sphi 0, %s69
    %s72 = sphi 0, %s71
    %s86 = sphi 0, %s72
    %s90 = sphi 0, %s90
    %s92 = sphi 0, %s90
    %s93 = sphi 0, %s92
    %s107 = sphi 0, %s93
    %s115 = sphi 0, %s117
    %s118 = sphi 0, %s115
    %s119 = sphi 0, %s118
    %s135 = sphi 0, %s119
  $region4: #{conv_bn_relu.1} parent=0 // loop_header_branch
    %12 = sbr.rel (%p10) target = $region8
  $region5: #{conv_bn_relu.1} parent=0 // loop_body
    %s14 = ssub.s32 %s9, 1
    %s15 = ssub.s32 %s9, 2
    %s22 = sadd.s32 1, %s17
    %p23 = scmp.ge.s32.totalorder %s22, 1
    %s24 = scalar_select %p23, 0, %s22
    %s25 = sadd.s32 1, %s16
    %s26 = scalar_select %p23, %s25, %s16
    %p27 = scmp.ge.s32.totalorder %s26, 2
    %s28 = scalar_select %p27, 0, %s26
    %s29 = smul.u32 %s16, 18
    %s30 = smul.u32 %s17, 16
    %s31 = sadd.s32 %s29, %s30
    %s32 = ssub.s32 0, 0
    %s33 = ssub.s32 0, 0
    %s34 = ssub.s32 0, 0
    %s35 = ssub.s32 0, 0
    %s36 = smul.u32 %s28, 18
    %s37 = smul.u32 %s24, 16
    %s38 = sadd.s32 %s36, %s37
    %s39 = ssub.s32 0, 0
    %s40 = ssub.s32 0, 0
    %s41 = ssub.s32 0, 0
    %s42 = ssub.s32 0, 0
    %s43 = ssub.s32 %s31, %s38
    %p44 = scmp.eq.s32.totalorder %s43, 0
    %s46 = sadd.s32 %s45, 1
    %s47 = scalar_select %p44, %s45, %s46
    %p50 = pneg %p44
    %p51 = scmp.eq.s32.totalorder %s9, 1
    %p52 = por %p50, %p51
    %p53 = scmp.ne.s32.totalorder %s45, %s48
    %p54 = scmp.eq.s32.totalorder %s9, 0
    %p55 = por %p53, %p54
    %p56 = scmp.ne.s32.totalorder %s45, %s48
    %p57 = scmp.eq.s32.totalorder %s14, 1
    %p58 = por %p56, %p57
    %p59 = scmp.ne.s32.totalorder %s48, %s49
    %p60 = scmp.eq.s32.totalorder %s14, 0
    %p61 = por %p59, %p60
    %p62 = scmp.ne.s32.totalorder %s48, %s49
    %p63 = scmp.eq.s32.totalorder %s15, 1
    %p64 = por %p62, %p63
    %p66 = scmp.ne.s32.totalorder %s49, %s65
    %p67 = scmp.eq.s32.totalorder %s15, 0
    %p68 = por %p66, %p67
    %s70 = sadd.s32 %s69, 1
    %p73 = scmp.eq.s32.totalorder %s9, 1
    %p74 = scmp.ne.s32.totalorder %s69, %s71
    %p75 = scmp.eq.s32.totalorder %s9, 0
    %p76 = por %p74, %p75
    %p77 = scmp.ne.s32.totalorder %s69, %s71
    %p78 = scmp.eq.s32.totalorder %s14, 1
    %p79 = por %p77, %p78
    %p80 = scmp.ne.s32.totalorder %s71, %s72
    %p81 = scmp.eq.s32.totalorder %s14, 0
    %p82 = por %p80, %p81
    %p83 = scmp.ne.s32.totalorder %s71, %s72
    %p84 = scmp.eq.s32.totalorder %s15, 1
    %p85 = por %p83, %p84
    %p87 = scmp.ne.s32.totalorder %s72, %s86
    %p88 = scmp.eq.s32.totalorder %s15, 0
    %p89 = por %p87, %p88
    %s91 = sadd.s32 %s90, 1
    %p94 = scmp.eq.s32.totalorder %s9, 1
    %p95 = scmp.ne.s32.totalorder %s90, %s92
    %p96 = scmp.eq.s32.totalorder %s9, 0
    %p97 = por %p95, %p96
    %p98 = scmp.ne.s32.totalorder %s90, %s92
    %p99 = scmp.eq.s32.totalorder %s14, 1
    %p100 = por %p98, %p99
    %p101 = scmp.ne.s32.totalorder %s92, %s93
    %p102 = scmp.eq.s32.totalorder %s14, 0
    %p103 = por %p101, %p102
    %p104 = scmp.ne.s32.totalorder %s92, %s93
    %p105 = scmp.eq.s32.totalorder %s15, 1
    %p106 = por %p104, %p105
    %p108 = scmp.ne.s32.totalorder %s93, %s107
    %p109 = scmp.eq.s32.totalorder %s15, 0
    %p110 = por %p108, %p109
    %s111 = sadd.s32 %s16, %s17
    %s112 = sadd.s32 %s28, %s24
    %s113 = ssub.s32 %s111, %s112
    %p114 = scmp.eq.s32.totalorder %s113, 0
    %s116 = sadd.s32 %s115, 1
    %s117 = scalar_select %p114, %s115, %s116
    %p120 = pneg %p114
    %p121 = scmp.eq.s32.totalorder %s9, 1
    %p122 = por %p120, %p121
    %p123 = scmp.ne.s32.totalorder %s115, %s118
    %p124 = scmp.eq.s32.totalorder %s9, 0
    %p125 = por %p123, %p124
    %p126 = scmp.ne.s32.totalorder %s115, %s118
    %p127 = scmp.eq.s32.totalorder %s14, 1
    %p128 = por %p126, %p127
    %p129 = scmp.ne.s32.totalorder %s118, %s119
    %p130 = scmp.eq.s32.totalorder %s14, 0
    %p131 = por %p129, %p130
    %p132 = scmp.ne.s32.totalorder %s118, %s119
    %p133 = scmp.eq.s32.totalorder %s15, 1
    %p134 = por %p132, %p133
    %p136 = scmp.ne.s32.totalorder %s119, %s135
    %p137 = scmp.eq.s32.totalorder %s15, 0
    %p138 = por %p136, %p137
    %p139 = scmp.le.s32.totalorder 1, %s9
    %p140 = scmp.lt.s32.totalorder %s9, 3
    %p141 = pnand %p139, %p140
    %p142 = pneg %p141
    // Predicated region
    $region9: #{conv_bn_relu.1} parent=5 // pred_check
      _
    $region10: #{conv_bn_relu.1} parent=5 // pred_check_branch
      %144 = sbr.rel (%p141) target = $region12
    $region11: #{conv_bn_relu.1} parent=5 // pred_region
      %s145 = ssub.s32 %s9, 1
      // Predicated region
      $region13: #{conv_bn_relu.1} parent=11 // pred_check
        %p146 = pneg %p82
      $region14: #{conv_bn_relu.1} parent=11 // pred_check_branch
        %148 = sbr.rel (%p146) target = $region16
      $region15: #{conv_bn_relu.1} parent=11 // pred_region
        _
      $region16: #{conv_bn_relu.1} parent=11 // pred_fallthru
        _
      // Predicated region
      $region17: #{conv_bn_relu.1} parent=11 // pred_check
        %p149 = pneg %p103
      $region18: #{conv_bn_relu.1} parent=11 // pred_check_branch
        %151 = sbr.rel (%p149) target = $region20
      $region19: #{conv_bn_relu.1} parent=11 // pred_region
        _
      $region20: #{conv_bn_relu.1} parent=11 // pred_fallthru
        _
    $region12: #{conv_bn_relu.1} parent=5 // pred_fallthru
      _
    %p152 = scmp.lt.s32.totalorder %s9, 2
    // Predicated region
    $region21: #{conv_bn_relu.1} parent=5 // pred_check
      %p153 = pneg %p152
    $region22: #{conv_bn_relu.1} parent=5 // pred_check_branch
      %155 = sbr.rel (%p153) target = $region24
    $region23: #{conv_bn_relu.1} parent=5 // pred_region
      // Predicated region
      $region25: #{conv_bn_relu.1} parent=23 // pred_check
        %p156 = pneg %p55
      $region26: #{conv_bn_relu.1} parent=23 // pred_check_branch
        %158 = sbr.rel (%p156) target = $region28
      $region27: #{conv_bn_relu.1} parent=23 // pred_region
        %s159 = smul.u32 %s16, 18
        %s160 = smul.u32 %s17, 16
        %s161 = sadd.s32 %s159, %s160
        %s162 = ssub.s32 0, 0
        %s163 = ssub.s32 0, 0
        %s164 = ssub.s32 0, 0
        %s165 = ssub.s32 0, 0
        %p166 = scmp.lt.s32.totalorder %s161, 35
        %s167 = scalar_select %p166, %s161, 35
        %s168 = smul.addr %s167, 3
        %s169 = smul.addr %s168, 4
        %s170 = scalar_lea.vmem %s0, %s169
        %s171 = smul.u32 %s16, 18
        %s172 = smul.u32 %s17, 16
        %s173 = sadd.s32 %s171, %s172
        %s174 = ssub.s32 0, 0
        %s175 = ssub.s32 0, 0
        %s176 = ssub.s32 0, 0
        %s177 = ssub.s32 0, 0
      $region28: #{conv_bn_relu.1} parent=23 // pred_fallthru
        _
    $region24: #{conv_bn_relu.1} parent=5 // pred_fallthru
      _
    %p178 = scmp.le.s32.totalorder 1, %s9
    %p179 = scmp.lt.s32.totalorder %s9, 3
    %p180 = pnand %p178, %p179
    %p181 = pneg %p180
    // Predicated region
    $region29: #{conv_bn_relu.1} parent=5 // pred_check
      _
    $region30: #{conv_bn_relu.1} parent=5 // pred_check_branch
      %183 = sbr.rel (%p180) target = $region32
    $region31: #{conv_bn_relu.1} parent=5 // pred_region
      %s184 = ssub.s32 %s9, 1
      %s185 = smul.u32 %s18, 18
      %s186 = smul.u32 %s19, 16
      %s187 = sadd.s32 %s185, %s186
      %s188 = ssub.s32 0, 0
      %s189 = ssub.s32 0, 0
      %s190 = ssub.s32 0, 0
      %s191 = ssub.s32 0, 0
      %p192 = scmp.lt.s32.totalorder %s187, 35
      %s193 = scalar_select %p192, %s187, 35
      %s194 = smul.addr %s193, 3
      %s195 = smul.addr %s194, 4
      %s196 = scalar_lea.vmem %s0, %s195
      %p197 = pneg %p61
      %p198 = pneg %p58
      %p199 = pneg %p82
      %p200 = pneg %p79
      %p201 = pneg %p103
      %p202 = pneg %p100
      %p203 = pneg %p131
      %p204 = pneg %p128
      %s205 = sadd.s32 %s18, %s19
      %p206 = scmp.lt.s32.totalorder %s205, 1
      %s207 = scalar_select %p206, %s205, 1
      %s208 = smul.addr %s207, 32
      %s209 = smul.addr %s208, 4
      %s210 = scalar_lea.vmem %s3, %s209
      %s211 = smul.u32 %s18, 18
      %s212 = smul.u32 %s19, 16
      %s213 = sadd.s32 %s211, %s212
      %s214 = ssub.s32 0, 0
      %s215 = ssub.s32 0, 0
      %s216 = ssub.s32 0, 0
      %s217 = ssub.s32 0, 0
      %p218 = scmp.lt.s32.totalorder %s213, 35
      %s219 = scalar_select %p218, %s213, 35
      %s220 = smul.addr %s219, 3
      %s221 = smul.addr %s220, 4
      %s222 = scalar_lea.vmem %s0, %s221
      %s223 = smul.u32 %s18, 18
      %s224 = smul.u32 %s19, 16
      %s225 = sadd.s32 %s223, %s224
      %s226 = ssub.s32 0, 0
      %s227 = ssub.s32 0, 0
      %s228 = ssub.s32 0, 0
      %s229 = ssub.s32 0, 0
      %s230 = sadd.s32 %s18, %s19
      %p231 = scmp.lt.s32.totalorder %s230, 1
      %s232 = scalar_select %p231, %s230, 1
      %s233 = smul.addr %s232, 32
      %s234 = smul.addr %s233, 4
      %s235 = scalar_lea.vmem %s3, %s234
      %s236 = sadd.s32 %s18, %s19
      %v238 = vld [vmem:[%s222] sm:$0xf]
      %v239 = vld [vmem:[%s222 + $0x4] sm:$0xf]
      %v240 = vld [vmem:[%s222 + $0x8] sm:$0x1]
      %v241 = vld [vmem:[%s222 + $0xc] sm:$0xf]
      %v242 = vld [vmem:[%s222 + $0x10] sm:$0xf]
      %v243 = vld [vmem:[%s222 + $0x14] sm:$0x1]
      %v244 = vld [vmem:[%s222 + $0x18] sm:$0xf]
      %v245 = vld [vmem:[%s222 + $0x1c] sm:$0xf]
      %v246 = vld [vmem:[%s222 + $0x20] sm:$0x1]
      %v247 = vld [vmem:[%s222 + $0x24] sm:$0xf]
      %v248 = vld [vmem:[%s222 + $0x28] sm:$0xf]
      %v249 = vld [vmem:[%s222 + $0x2c] sm:$0x1]
      %v250 = vld [vmem:[%s222 + $0x30] sm:$0xf]
      %v251 = vld [vmem:[%s222 + $0x34] sm:$0xf]
      %v252 = vld [vmem:[%s222 + $0x38] sm:$0x1]
      %v253 = vld [vmem:[%s222 + $0x3c] sm:$0xf]
      %v254 = vld [vmem:[%s222 + $0x40] sm:$0xf]
      %v255 = vld [vmem:[%s222 + $0x44] sm:$0x1]
      %v256 = vld [vmem:[%s222 + $0x48] sm:$0xf]
      %v257 = vld [vmem:[%s222 + $0x4c] sm:$0xf]
      %v258 = vld [vmem:[%s222 + $0x50] sm:$0x1]
      %v259 = vld [vmem:[%s222 + $0x54] sm:$0xf]
      %v260 = vld [vmem:[%s222 + $0x58] sm:$0xf]
      %v261 = vld [vmem:[%s222 + $0x5c] sm:$0x1]
      %v262 = vld [vmem:[%s222 + $0x60] sm:$0xf]
      %v263 = vld [vmem:[%s222 + $0x64] sm:$0xf]
      %v264 = vld [vmem:[%s222 + $0x68] sm:$0x1]
      %v265 = vld [vmem:[%s222 + $0x6c] sm:$0xf]
      %v266 = vld [vmem:[%s222 + $0x70] sm:$0xf]
      %v267 = vld [vmem:[%s222 + $0x74] sm:$0x1]
      %v268 = vld [vmem:[%s222 + $0x78] sm:$0xf]
      %v269 = vld [vmem:[%s222 + $0x7c] sm:$0xf]
      %v270 = vld [vmem:[%s222 + $0x80] sm:$0x1]
      %v271 = vld [vmem:[%s222 + $0x84] sm:$0xf]
      %v272 = vld [vmem:[%s222 + $0x88] sm:$0xf]
      %v273 = vld [vmem:[%s222 + $0x8c] sm:$0x1]
      %v274 = vld [vmem:[%s222 + $0x90] sm:$0xf]
      %v275 = vld [vmem:[%s222 + $0x94] sm:$0xf]
      %v276 = vld [vmem:[%s222 + $0x98] sm:$0x1]
      %v277 = vld [vmem:[%s222 + $0x9c] sm:$0xf]
      %v278 = vld [vmem:[%s222 + $0xa0] sm:$0xf]
      %v279 = vld [vmem:[%s222 + $0xa4] sm:$0x1]
      %v280 = vld [vmem:[%s222 + $0xa8] sm:$0xf]
      %v281 = vld [vmem:[%s222 + $0xac] sm:$0xf]
      %v282 = vld [vmem:[%s222 + $0xb0] sm:$0x1]
      %v283 = vld [vmem:[%s222 + $0xb4] sm:$0xf]
      %v284 = vld [vmem:[%s222 + $0xb8] sm:$0xf]
      %v285 = vld [vmem:[%s222 + $0xbc] sm:$0x1]
      %v286 = vld [vmem:[%s222 + $0xc0] sm:$0xf]
      %v287 = vld [vmem:[%s222 + $0xc4] sm:$0xf]
      %v288 = vld [vmem:[%s222 + $0xc8] sm:$0x1]
      %v289 = vld [vmem:[%s222 + $0xcc] sm:$0xf]
      %v290 = vld [vmem:[%s222 + $0xd0] sm:$0xf]
      %v291 = vld [vmem:[%s222 + $0xd4] sm:$0x1]
      %vm292 = vsmask.f32 3328
      %vm293 = vsmask.f32 7440
      %vm294 = vmor %vm292, %vm293
      %v296 = vshrl.u32 %v238, 16
      %v298 = vrot.slane %v296, 4
      %v299 = vshll.u32 %v238, 16
      %v301 = vrot.slane %v299, 5
      %v302 = vor.u32 %v298, %v301
      %v303 = vrot.slane %v302, 4
      %v305 = vshll.u32 %v239, 16
      %v307 = vrot.slane %v305, 5
      %v308 = vsel %vm294, %v303, %v307
      %v309 = vshrl.u32 %v239, 16
      %v311 = vrot.slane %v309, 4
      %v312 = vor.u32 %v311, %v307
      %v313 = vrot.slane %v312, 4
      %v315 = vshll.u32 %v240, 16
      %v317 = vrot.slane %v315, 5
      %v318 = vsel %vm294, %v313, %v317
      %v320 = vshrl.u32 %v241, 16
      %v322 = vrot.slane %v320, 4
      %v323 = vshll.u32 %v241, 16
      %v325 = vrot.slane %v323, 5
      %v326 = vor.u32 %v322, %v325
      %v327 = vrot.slane %v326, 4
      %v329 = vshll.u32 %v242, 16
      %v331 = vrot.slane %v329, 5
      %v332 = vsel %vm294, %v327, %v331
      %v333 = vshrl.u32 %v242, 16
      %v335 = vrot.slane %v333, 4
      %v336 = vor.u32 %v335, %v331
      %v337 = vrot.slane %v336, 4
      %v339 = vshll.u32 %v243, 16
      %v341 = vrot.slane %v339, 5
      %v342 = vsel %vm294, %v337, %v341
      %v344 = vshrl.u32 %v244, 16
      %v346 = vrot.slane %v344, 4
      %v347 = vshll.u32 %v244, 16
      %v349 = vrot.slane %v347, 5
      %v350 = vor.u32 %v346, %v349
      %v351 = vrot.slane %v350, 4
      %v353 = vshll.u32 %v245, 16
      %v355 = vrot.slane %v353, 5
      %v356 = vsel %vm294, %v351, %v355
      %v357 = vshrl.u32 %v245, 16
      %v359 = vrot.slane %v357, 4
      %v360 = vor.u32 %v359, %v355
      %v361 = vrot.slane %v360, 4
      %v363 = vshll.u32 %v246, 16
      %v365 = vrot.slane %v363, 5
      %v366 = vsel %vm294, %v361, %v365
      %v368 = vshrl.u32 %v247, 16
      %v370 = vrot.slane %v368, 4
      %v371 = vshll.u32 %v247, 16
      %v373 = vrot.slane %v371, 5
      %v374 = vor.u32 %v370, %v373
      %v375 = vrot.slane %v374, 4
      %v377 = vshll.u32 %v248, 16
      %v379 = vrot.slane %v377, 5
      %v380 = vsel %vm294, %v375, %v379
      %v381 = vshrl.u32 %v248, 16
      %v383 = vrot.slane %v381, 4
      %v384 = vor.u32 %v383, %v379
      %v385 = vrot.slane %v384, 4
      %v387 = vshll.u32 %v249, 16
      %v389 = vrot.slane %v387, 5
      %v390 = vsel %vm294, %v385, %v389
      %v392 = vshrl.u32 %v250, 16
      %v394 = vrot.slane %v392, 4
      %v395 = vshll.u32 %v250, 16
      %v397 = vrot.slane %v395, 5
      %v398 = vor.u32 %v394, %v397
      %v399 = vrot.slane %v398, 4
      %v401 = vshll.u32 %v251, 16
      %v403 = vrot.slane %v401, 5
      %v404 = vsel %vm294, %v399, %v403
      %v405 = vshrl.u32 %v251, 16
      %v407 = vrot.slane %v405, 4
      %v408 = vor.u32 %v407, %v403
      %v409 = vrot.slane %v408, 4
      %v411 = vshll.u32 %v252, 16
      %v413 = vrot.slane %v411, 5
      %v414 = vsel %vm294, %v409, %v413
      %v416 = vshrl.u32 %v253, 16
      %v418 = vrot.slane %v416, 4
      %v419 = vshll.u32 %v253, 16
      %v421 = vrot.slane %v419, 5
      %v422 = vor.u32 %v418, %v421
      %v423 = vrot.slane %v422, 4
      %v425 = vshll.u32 %v254, 16
      %v427 = vrot.slane %v425, 5
      %v428 = vsel %vm294, %v423, %v427
      %v429 = vshrl.u32 %v254, 16
      %v431 = vrot.slane %v429, 4
      %v432 = vor.u32 %v431, %v427
      %v433 = vrot.slane %v432, 4
      %v435 = vshll.u32 %v255, 16
      %v437 = vrot.slane %v435, 5
      %v438 = vsel %vm294, %v433, %v437
      %v440 = vshrl.u32 %v256, 16
      %v442 = vrot.slane %v440, 4
      %v443 = vshll.u32 %v256, 16
      %v445 = vrot.slane %v443, 5
      %v446 = vor.u32 %v442, %v445
      %v447 = vrot.slane %v446, 4
      %v449 = vshll.u32 %v257, 16
      %v451 = vrot.slane %v449, 5
      %v452 = vsel %vm294, %v447, %v451
      %v453 = vshrl.u32 %v257, 16
      %v455 = vrot.slane %v453, 4
      %v456 = vor.u32 %v455, %v451
      %v457 = vrot.slane %v456, 4
      %v459 = vshll.u32 %v258, 16
      %v461 = vrot.slane %v459, 5
      %v462 = vsel %vm294, %v457, %v461
      %v464 = vshrl.u32 %v259, 16
      %v466 = vrot.slane %v464, 4
      %v467 = vshll.u32 %v259, 16
      %v469 = vrot.slane %v467, 5
      %v470 = vor.u32 %v466, %v469
      %v471 = vrot.slane %v470, 4
      %v473 = vshll.u32 %v260, 16
      %v475 = vrot.slane %v473, 5
      %v476 = vsel %vm294, %v471, %v475
      %v477 = vshrl.u32 %v260, 16
      %v479 = vrot.slane %v477, 4
      %v480 = vor.u32 %v479, %v475
      %v481 = vrot.slane %v480, 4
      %v483 = vshll.u32 %v261, 16
      %v485 = vrot.slane %v483, 5
      %v486 = vsel %vm294, %v481, %v485
      %v488 = vshrl.u32 %v262, 16
      %v490 = vrot.slane %v488, 4
      %v491 = vshll.u32 %v262, 16
      %v493 = vrot.slane %v491, 5
      %v494 = vor.u32 %v490, %v493
      %v495 = vrot.slane %v494, 4
      %v497 = vshll.u32 %v263, 16
      %v499 = vrot.slane %v497, 5
      %v500 = vsel %vm294, %v495, %v499
      %v501 = vshrl.u32 %v263, 16
      %v503 = vrot.slane %v501, 4
      %v504 = vor.u32 %v503, %v499
      %v505 = vrot.slane %v504, 4
      %v507 = vshll.u32 %v264, 16
      %v509 = vrot.slane %v507, 5
      %v510 = vsel %vm294, %v505, %v509
      %v512 = vshrl.u32 %v265, 16
      %v514 = vrot.slane %v512, 4
      %v515 = vshll.u32 %v265, 16
      %v517 = vrot.slane %v515, 5
      %v518 = vor.u32 %v514, %v517
      %v519 = vrot.slane %v518, 4
      %v521 = vshll.u32 %v266, 16
      %v523 = vrot.slane %v521, 5
      %v524 = vsel %vm294, %v519, %v523
      %v525 = vshrl.u32 %v266, 16
      %v527 = vrot.slane %v525, 4
      %v528 = vor.u32 %v527, %v523
      %v529 = vrot.slane %v528, 4
      %v531 = vshll.u32 %v267, 16
      %v533 = vrot.slane %v531, 5
      %v534 = vsel %vm294, %v529, %v533
      %v536 = vshrl.u32 %v268, 16
      %v538 = vrot.slane %v536, 4
      %v539 = vshll.u32 %v268, 16
      %v541 = vrot.slane %v539, 5
      %v542 = vor.u32 %v538, %v541
      %v543 = vrot.slane %v542, 4
      %v545 = vshll.u32 %v269, 16
      %v547 = vrot.slane %v545, 5
      %v548 = vsel %vm294, %v543, %v547
      %v549 = vshrl.u32 %v269, 16
      %v551 = vrot.slane %v549, 4
      %v552 = vor.u32 %v551, %v547
      %v553 = vrot.slane %v552, 4
      %v555 = vshll.u32 %v270, 16
      %v557 = vrot.slane %v555, 5
      %v558 = vsel %vm294, %v553, %v557
      %v560 = vshrl.u32 %v271, 16
      %v562 = vrot.slane %v560, 4
      %v563 = vshll.u32 %v271, 16
      %v565 = vrot.slane %v563, 5
      %v566 = vor.u32 %v562, %v565
      %v567 = vrot.slane %v566, 4
      %v569 = vshll.u32 %v272, 16
      %v571 = vrot.slane %v569, 5
      %v572 = vsel %vm294, %v567, %v571
      %v573 = vshrl.u32 %v272, 16
      %v575 = vrot.slane %v573, 4
      %v576 = vor.u32 %v575, %v571
      %v577 = vrot.slane %v576, 4
      %v579 = vshll.u32 %v273, 16
      %v581 = vrot.slane %v579, 5
      %v582 = vsel %vm294, %v577, %v581
      %v584 = vshrl.u32 %v274, 16
      %v586 = vrot.slane %v584, 4
      %v587 = vshll.u32 %v274, 16
      %v589 = vrot.slane %v587, 5
      %v590 = vor.u32 %v586, %v589
      %v591 = vrot.slane %v590, 4
      %v593 = vshll.u32 %v275, 16
      %v595 = vrot.slane %v593, 5
      %v596 = vsel %vm294, %v591, %v595
      %v597 = vshrl.u32 %v275, 16
      %v599 = vrot.slane %v597, 4
      %v600 = vor.u32 %v599, %v595
      %v601 = vrot.slane %v600, 4
      %v603 = vshll.u32 %v276, 16
      %v605 = vrot.slane %v603, 5
      %v606 = vsel %vm294, %v601, %v605
      %v608 = vshrl.u32 %v277, 16
      %v610 = vrot.slane %v608, 4
      %v611 = vshll.u32 %v277, 16
      %v613 = vrot.slane %v611, 5
      %v614 = vor.u32 %v610, %v613
      %v615 = vrot.slane %v614, 4
      %v617 = vshll.u32 %v278, 16
      %v619 = vrot.slane %v617, 5
      %v620 = vsel %vm294, %v615, %v619
      %v621 = vshrl.u32 %v278, 16
      %v623 = vrot.slane %v621, 4
      %v624 = vor.u32 %v623, %v619
      %v625 = vrot.slane %v624, 4
      %v627 = vshll.u32 %v279, 16
      %v629 = vrot.slane %v627, 5
      %v630 = vsel %vm294, %v625, %v629
      %v632 = vshrl.u32 %v280, 16
      %v634 = vrot.slane %v632, 4
      %v635 = vshll.u32 %v280, 16
      %v637 = vrot.slane %v635, 5
      %v638 = vor.u32 %v634, %v637
      %v639 = vrot.slane %v638, 4
      %v641 = vshll.u32 %v281, 16
      %v643 = vrot.slane %v641, 5
      %v644 = vsel %vm294, %v639, %v643
      %v645 = vshrl.u32 %v281, 16
      %v647 = vrot.slane %v645, 4
      %v648 = vor.u32 %v647, %v643
      %v649 = vrot.slane %v648, 4
      %v651 = vshll.u32 %v282, 16
      %v653 = vrot.slane %v651, 5
      %v654 = vsel %vm294, %v649, %v653
      %v656 = vshrl.u32 %v283, 16
      %v658 = vrot.slane %v656, 4
      %v659 = vshll.u32 %v283, 16
      %v661 = vrot.slane %v659, 5
      %v662 = vor.u32 %v658, %v661
      %v663 = vrot.slane %v662, 4
      %v665 = vshll.u32 %v284, 16
      %v667 = vrot.slane %v665, 5
      %v668 = vsel %vm294, %v663, %v667
      %v669 = vshrl.u32 %v284, 16
      %v671 = vrot.slane %v669, 4
      %v672 = vor.u32 %v671, %v667
      %v673 = vrot.slane %v672, 4
      %v675 = vshll.u32 %v285, 16
      %v677 = vrot.slane %v675, 5
      %v678 = vsel %vm294, %v673, %v677
      %vm727 = vcmask 1042432
      %vm728 = vcmask 1046532
      %vm729 = vmor %vm727, %vm728
      %v730 = vrot.slane %v238, 5
      %v731 = vrot.slane %v730, 4
      %v732 = vrot.slane %v239, 5
      %v733 = vsel %vm729, %v731, %v732
      %v734 = vrot.slane %v732, 4
      %v735 = vrot.slane %v240, 5
      %v736 = vsel %vm729, %v734, %v735
      %v737 = vrot.slane %v241, 5
      %v738 = vrot.slane %v737, 4
      %v739 = vrot.slane %v242, 5
      %v740 = vsel %vm729, %v738, %v739
      %v741 = vrot.slane %v739, 4
      %v742 = vrot.slane %v243, 5
      %v743 = vsel %vm729, %v741, %v742
      %v744 = vrot.slane %v244, 5
      %v745 = vrot.slane %v744, 4
      %v746 = vrot.slane %v245, 5
      %v747 = vsel %vm729, %v745, %v746
      %v748 = vrot.slane %v746, 4
      %v749 = vrot.slane %v246, 5
      %v750 = vsel %vm729, %v748, %v749
      %v751 = vrot.slane %v247, 5
      %v752 = vrot.slane %v751, 4
      %v753 = vrot.slane %v248, 5
      %v754 = vsel %vm729, %v752, %v753
      %v755 = vrot.slane %v753, 4
      %v756 = vrot.slane %v249, 5
      %v757 = vsel %vm729, %v755, %v756
      %v758 = vrot.slane %v250, 5
      %v759 = vrot.slane %v758, 4
      %v760 = vrot.slane %v251, 5
      %v761 = vsel %vm729, %v759, %v760
      %v762 = vrot.slane %v760, 4
      %v763 = vrot.slane %v252, 5
      %v764 = vsel %vm729, %v762, %v763
      %v765 = vrot.slane %v253, 5
      %v766 = vrot.slane %v765, 4
      %v767 = vrot.slane %v254, 5
      %v768 = vsel %vm729, %v766, %v767
      %v769 = vrot.slane %v767, 4
      %v770 = vrot.slane %v255, 5
      %v771 = vsel %vm729, %v769, %v770
      %v772 = vrot.slane %v256, 5
      %v773 = vrot.slane %v772, 4
      %v774 = vrot.slane %v257, 5
      %v775 = vsel %vm729, %v773, %v774
      %v776 = vrot.slane %v774, 4
      %v777 = vrot.slane %v258, 5
      %v778 = vsel %vm729, %v776, %v777
      %v779 = vrot.slane %v259, 5
      %v780 = vrot.slane %v779, 4
      %v781 = vrot.slane %v260, 5
      %v782 = vsel %vm729, %v780, %v781
      %v783 = vrot.slane %v781, 4
      %v784 = vrot.slane %v261, 5
      %v785 = vsel %vm729, %v783, %v784
      %v786 = vrot.slane %v262, 5
      %v787 = vrot.slane %v786, 4
      %v788 = vrot.slane %v263, 5
      %v789 = vsel %vm729, %v787, %v788
      %v790 = vrot.slane %v788, 4
      %v791 = vrot.slane %v264, 5
      %v792 = vsel %vm729, %v790, %v791
      %v793 = vrot.slane %v265, 5
      %v794 = vrot.slane %v793, 4
      %v795 = vrot.slane %v266, 5
      %v796 = vsel %vm729, %v794, %v795
      %v797 = vrot.slane %v795, 4
      %v798 = vrot.slane %v267, 5
      %v799 = vsel %vm729, %v797, %v798
      %v800 = vrot.slane %v268, 5
      %v801 = vrot.slane %v800, 4
      %v802 = vrot.slane %v269, 5
      %v803 = vsel %vm729, %v801, %v802
      %v804 = vrot.slane %v802, 4
      %v805 = vrot.slane %v270, 5
      %v806 = vsel %vm729, %v804, %v805
      %v807 = vrot.slane %v271, 5
      %v808 = vrot.slane %v807, 4
      %v809 = vrot.slane %v272, 5
      %v810 = vsel %vm729, %v808, %v809
      %v811 = vrot.slane %v809, 4
      %v812 = vrot.slane %v273, 5
      %v813 = vsel %vm729, %v811, %v812
      %v814 = vrot.slane %v274, 5
      %v815 = vrot.slane %v814, 4
      %v816 = vrot.slane %v275, 5
      %v817 = vsel %vm729, %v815, %v816
      %v818 = vrot.slane %v816, 4
      %v819 = vrot.slane %v276, 5
      %v820 = vsel %vm729, %v818, %v819
      %v821 = vrot.slane %v277, 5
      %v822 = vrot.slane %v821, 4
      %v823 = vrot.slane %v278, 5
      %v824 = vsel %vm729, %v822, %v823
      %v825 = vrot.slane %v823, 4
      %v826 = vrot.slane %v279, 5
      %v827 = vsel %vm729, %v825, %v826
      %v828 = vrot.slane %v280, 5
      %v829 = vrot.slane %v828, 4
      %v830 = vrot.slane %v281, 5
      %v831 = vsel %vm729, %v829, %v830
      %v832 = vrot.slane %v830, 4
      %v833 = vrot.slane %v282, 5
      %v834 = vsel %vm729, %v832, %v833
      %v835 = vrot.slane %v283, 5
      %v836 = vrot.slane %v835, 4
      %v837 = vrot.slane %v284, 5
      %v838 = vsel %vm729, %v836, %v837
      %v839 = vrot.slane %v837, 4
      %v840 = vrot.slane %v285, 5
      %v841 = vsel %vm729, %v839, %v840
      %v843 = vshrl.u32 %v286, 16
      %v845 = vrot.slane %v843, 4
      %v846 = vshll.u32 %v286, 16
      %v848 = vrot.slane %v846, 5
      %v849 = vor.u32 %v845, %v848
      %v850 = vrot.slane %v849, 4
      %v852 = vshll.u32 %v287, 16
      %v854 = vrot.slane %v852, 5
      %v855 = vsel %vm294, %v850, %v854
      %v856 = vshrl.u32 %v287, 16
      %v858 = vrot.slane %v856, 4
      %v859 = vor.u32 %v858, %v854
      %v860 = vrot.slane %v859, 4
      %v862 = vshll.u32 %v288, 16
      %v864 = vrot.slane %v862, 5
      %v865 = vsel %vm294, %v860, %v864
      %v869 = vrot.slane %v286, 5
      %v870 = vrot.slane %v869, 4
      %v871 = vrot.slane %v287, 5
      %v872 = vsel %vm729, %v870, %v871
      %v873 = vrot.slane %v871, 4
      %v874 = vrot.slane %v288, 5
      %v875 = vsel %vm729, %v873, %v874
      %v877 = vshrl.u32 %v289, 16
      %v879 = vrot.slane %v877, 4
      %v880 = vshll.u32 %v289, 16
      %v882 = vrot.slane %v880, 5
      %v883 = vor.u32 %v879, %v882
      %v884 = vrot.slane %v883, 4
      %v886 = vshll.u32 %v290, 16
      %v888 = vrot.slane %v886, 5
      %v889 = vsel %vm294, %v884, %v888
      %v890 = vshrl.u32 %v290, 16
      %v892 = vrot.slane %v890, 4
      %v893 = vor.u32 %v892, %v888
      %v894 = vrot.slane %v893, 4
      %v896 = vshll.u32 %v291, 16
      %v898 = vrot.slane %v896, 5
      %v899 = vsel %vm294, %v894, %v898
      %v903 = vrot.slane %v289, 5
      %v904 = vrot.slane %v903, 4
      %v905 = vrot.slane %v290, 5
      %v906 = vsel %vm729, %v904, %v905
      %v907 = vrot.slane %v905, 4
      %v908 = vrot.slane %v291, 5
      %v909 = vsel %vm729, %v907, %v908
      %v910 = vunpack.c.l.b16 %v238
      %v911 = vunpack.c.l.b16 %v239
      %v912 = vunpack.c.l.b16 %v241
      %v913 = vunpack.c.l.b16 %v242
      %v914 = vunpack.c.l.b16 %v244
      %v915 = vunpack.c.l.b16 %v245
      %v916 = vunpack.c.l.b16 %v247
      %v917 = vunpack.c.l.b16 %v248
      %v918 = vunpack.c.l.b16 %v250
      %v919 = vunpack.c.l.b16 %v251
      %v920 = vunpack.c.l.b16 %v253
      %v921 = vunpack.c.l.b16 %v254
      %v922 = vunpack.c.l.b16 %v256
      %v923 = vunpack.c.l.b16 %v257
      %v924 = vunpack.c.l.b16 %v259
      %v925 = vunpack.c.l.b16 %v260
      %v926 = vunpack.c.l.b16 %v262
      %v927 = vunpack.c.l.b16 %v263
      %v928 = vunpack.c.l.b16 %v265
      %v929 = vunpack.c.l.b16 %v266
      %v930 = vunpack.c.l.b16 %v268
      %v931 = vunpack.c.l.b16 %v269
      %v932 = vunpack.c.l.b16 %v271
      %v933 = vunpack.c.l.b16 %v272
      %v934 = vunpack.c.l.b16 %v274
      %v935 = vunpack.c.l.b16 %v275
      %v936 = vunpack.c.l.b16 %v277
      %v937 = vunpack.c.l.b16 %v278
      %v938 = vunpack.c.l.b16 %v280
      %v939 = vunpack.c.l.b16 %v281
      %v940 = vunpack.c.l.b16 %v283
      %v941 = vunpack.c.l.b16 %v284
      %v942 = vpack.c.b16 %v911, %v910
      %v943 = vpack.c.b16 %v913, %v912
      %v944 = vpack.c.b16 %v915, %v914
      %v945 = vpack.c.b16 %v917, %v916
      %v946 = vpack.c.b16 %v919, %v918
      %v947 = vpack.c.b16 %v921, %v920
      %v948 = vpack.c.b16 %v923, %v922
      %v949 = vpack.c.b16 %v925, %v924
      %v950 = vpack.c.b16 %v927, %v926
      %v951 = vpack.c.b16 %v929, %v928
      %v952 = vpack.c.b16 %v931, %v930
      %v953 = vpack.c.b16 %v933, %v932
      %v954 = vpack.c.b16 %v935, %v934
      %v955 = vpack.c.b16 %v937, %v936
      %v956 = vpack.c.b16 %v939, %v938
      %v957 = vpack.c.b16 %v941, %v940
      %v958 = vunpack.c.l.b16 %v308
      %v959 = vunpack.c.l.b16 %v318
      %v960 = vunpack.c.l.b16 %v332
      %v961 = vunpack.c.l.b16 %v342
      %v962 = vunpack.c.l.b16 %v356
      %v963 = vunpack.c.l.b16 %v366
      %v964 = vunpack.c.l.b16 %v380
      %v965 = vunpack.c.l.b16 %v390
      %v966 = vunpack.c.l.b16 %v404
      %v967 = vunpack.c.l.b16 %v414
      %v968 = vunpack.c.l.b16 %v428
      %v969 = vunpack.c.l.b16 %v438
      %v970 = vunpack.c.l.b16 %v452
      %v971 = vunpack.c.l.b16 %v462
      %v972 = vunpack.c.l.b16 %v476
      %v973 = vunpack.c.l.b16 %v486
      %v974 = vunpack.c.l.b16 %v500
      %v975 = vunpack.c.l.b16 %v510
      %v976 = vunpack.c.l.b16 %v524
      %v977 = vunpack.c.l.b16 %v534
      %v978 = vunpack.c.l.b16 %v548
      %v979 = vunpack.c.l.b16 %v558
      %v980 = vunpack.c.l.b16 %v572
      %v981 = vunpack.c.l.b16 %v582
      %v982 = vunpack.c.l.b16 %v596
      %v983 = vunpack.c.l.b16 %v606
      %v984 = vunpack.c.l.b16 %v620
      %v985 = vunpack.c.l.b16 %v630
      %v986 = vunpack.c.l.b16 %v644
      %v987 = vunpack.c.l.b16 %v654
      %v988 = vunpack.c.l.b16 %v668
      %v989 = vunpack.c.l.b16 %v678
      %v990 = vpack.c.b16 %v959, %v958
      %v991 = vpack.c.b16 %v961, %v960
      %v992 = vpack.c.b16 %v963, %v962
      %v993 = vpack.c.b16 %v965, %v964
      %v994 = vpack.c.b16 %v967, %v966
      %v995 = vpack.c.b16 %v969, %v968
      %v996 = vpack.c.b16 %v971, %v970
      %v997 = vpack.c.b16 %v973, %v972
      %v998 = vpack.c.b16 %v975, %v974
      %v999 = vpack.c.b16 %v977, %v976
      %v1000 = vpack.c.b16 %v979, %v978
      %v1001 = vpack.c.b16 %v981, %v980
      %v1002 = vpack.c.b16 %v983, %v982
      %v1003 = vpack.c.b16 %v985, %v984
      %v1004 = vpack.c.b16 %v987, %v986
      %v1005 = vpack.c.b16 %v989, %v988
      %1006 = vrot.lane.b32.xlu0 %v990, 4
      %v1007 = vpop.permute.xlu0 %1006
      %1008 = vrot.lane.b32.xlu0 %v991, 4
      %v1009 = vpop.permute.xlu0 %1008
      %1010 = vrot.lane.b32.xlu0 %v992, 4
      %v1011 = vpop.permute.xlu0 %1010
      %1012 = vrot.lane.b32.xlu0 %v993, 4
      %v1013 = vpop.permute.xlu0 %1012
      %1014 = vrot.lane.b32.xlu0 %v994, 4
      %v1015 = vpop.permute.xlu0 %1014
      %1016 = vrot.lane.b32.xlu0 %v995, 4
      %v1017 = vpop.permute.xlu0 %1016
      %1018 = vrot.lane.b32.xlu0 %v996, 4
      %v1019 = vpop.permute.xlu0 %1018
      %1020 = vrot.lane.b32.xlu0 %v997, 4
      %v1021 = vpop.permute.xlu0 %1020
      %1022 = vrot.lane.b32.xlu0 %v998, 4
      %v1023 = vpop.permute.xlu0 %1022
      %1024 = vrot.lane.b32.xlu0 %v999, 4
      %v1025 = vpop.permute.xlu0 %1024
      %1026 = vrot.lane.b32.xlu0 %v1000, 4
      %v1027 = vpop.permute.xlu0 %1026
      %1028 = vrot.lane.b32.xlu0 %v1001, 4
      %v1029 = vpop.permute.xlu0 %1028
      %1030 = vrot.lane.b32.xlu0 %v1002, 4
      %v1031 = vpop.permute.xlu0 %1030
      %1032 = vrot.lane.b32.xlu0 %v1003, 4
      %v1033 = vpop.permute.xlu0 %1032
      %1034 = vrot.lane.b32.xlu0 %v1004, 4
      %v1035 = vpop.permute.xlu0 %1034
      %1036 = vrot.lane.b32.xlu0 %v1005, 4
      %v1037 = vpop.permute.xlu0 %1036
      %v1038 = vunpack.c.l.b16 %v733
      %v1039 = vunpack.c.l.b16 %v736
      %v1040 = vunpack.c.l.b16 %v740
      %v1041 = vunpack.c.l.b16 %v743
      %v1042 = vunpack.c.l.b16 %v747
      %v1043 = vunpack.c.l.b16 %v750
      %v1044 = vunpack.c.l.b16 %v754
      %v1045 = vunpack.c.l.b16 %v757
      %v1046 = vunpack.c.l.b16 %v761
      %v1047 = vunpack.c.l.b16 %v764
      %v1048 = vunpack.c.l.b16 %v768
      %v1049 = vunpack.c.l.b16 %v771
      %v1050 = vunpack.c.l.b16 %v775
      %v1051 = vunpack.c.l.b16 %v778
      %v1052 = vunpack.c.l.b16 %v782
      %v1053 = vunpack.c.l.b16 %v785
      %v1054 = vunpack.c.l.b16 %v789
      %v1055 = vunpack.c.l.b16 %v792
      %v1056 = vunpack.c.l.b16 %v796
      %v1057 = vunpack.c.l.b16 %v799
      %v1058 = vunpack.c.l.b16 %v803
      %v1059 = vunpack.c.l.b16 %v806
      %v1060 = vunpack.c.l.b16 %v810
      %v1061 = vunpack.c.l.b16 %v813
      %v1062 = vunpack.c.l.b16 %v817
      %v1063 = vunpack.c.l.b16 %v820
      %v1064 = vunpack.c.l.b16 %v824
      %v1065 = vunpack.c.l.b16 %v827
      %v1066 = vunpack.c.l.b16 %v831
      %v1067 = vunpack.c.l.b16 %v834
      %v1068 = vunpack.c.l.b16 %v838
      %v1069 = vunpack.c.l.b16 %v841
      %v1070 = vpack.c.b16 %v1039, %v1038
      %v1071 = vpack.c.b16 %v1041, %v1040
      %v1072 = vpack.c.b16 %v1043, %v1042
      %v1073 = vpack.c.b16 %v1045, %v1044
      %v1074 = vpack.c.b16 %v1047, %v1046
      %v1075 = vpack.c.b16 %v1049, %v1048
      %v1076 = vpack.c.b16 %v1051, %v1050
      %v1077 = vpack.c.b16 %v1053, %v1052
      %v1078 = vpack.c.b16 %v1055, %v1054
      %v1079 = vpack.c.b16 %v1057, %v1056
      %v1080 = vpack.c.b16 %v1059, %v1058
      %v1081 = vpack.c.b16 %v1061, %v1060
      %v1082 = vpack.c.b16 %v1063, %v1062
      %v1083 = vpack.c.b16 %v1065, %v1064
      %v1084 = vpack.c.b16 %v1067, %v1066
      %v1085 = vpack.c.b16 %v1069, %v1068
      %1086 = vrot.lane.b32.xlu0 %v1070, 8
      %v1087 = vpop.permute.xlu0 %1086
      %1088 = vrot.lane.b32.xlu0 %v1071, 8
      %v1089 = vpop.permute.xlu0 %1088
      %1090 = vrot.lane.b32.xlu0 %v1072, 8
      %v1091 = vpop.permute.xlu0 %1090
      %1092 = vrot.lane.b32.xlu0 %v1073, 8
      %v1093 = vpop.permute.xlu0 %1092
      %1094 = vrot.lane.b32.xlu0 %v1074, 8
      %v1095 = vpop.permute.xlu0 %1094
      %1096 = vrot.lane.b32.xlu0 %v1075, 8
      %v1097 = vpop.permute.xlu0 %1096
      %1098 = vrot.lane.b32.xlu0 %v1076, 8
      %v1099 = vpop.permute.xlu0 %1098
      %1100 = vrot.lane.b32.xlu0 %v1077, 8
      %v1101 = vpop.permute.xlu0 %1100
      %1102 = vrot.lane.b32.xlu0 %v1078, 8
      %v1103 = vpop.permute.xlu0 %1102
      %1104 = vrot.lane.b32.xlu0 %v1079, 8
      %v1105 = vpop.permute.xlu0 %1104
      %1106 = vrot.lane.b32.xlu0 %v1080, 8
      %v1107 = vpop.permute.xlu0 %1106
      %1108 = vrot.lane.b32.xlu0 %v1081, 8
      %v1109 = vpop.permute.xlu0 %1108
      %1110 = vrot.lane.b32.xlu0 %v1082, 8
      %v1111 = vpop.permute.xlu0 %1110
      %1112 = vrot.lane.b32.xlu0 %v1083, 8
      %v1113 = vpop.permute.xlu0 %1112
      %1114 = vrot.lane.b32.xlu0 %v1084, 8
      %v1115 = vpop.permute.xlu0 %1114
      %1116 = vrot.lane.b32.xlu0 %v1085, 8
      %v1117 = vpop.permute.xlu0 %1116
      %v1118 = vunpack.c.l.b16 %v286
      %v1119 = vunpack.c.l.b16 %v287
      %v1120 = vpack.c.b16 %v1119, %v1118
      %1121 = vrot.lane.b32.xlu0 %v943, 12
      %v1122 = vpop.permute.xlu0 %1121
      %1123 = vrot.lane.b32.xlu0 %v944, 12
      %v1124 = vpop.permute.xlu0 %1123
      %1125 = vrot.lane.b32.xlu0 %v945, 12
      %v1126 = vpop.permute.xlu0 %1125
      %1127 = vrot.lane.b32.xlu0 %v946, 12
      %v1128 = vpop.permute.xlu0 %1127
      %1129 = vrot.lane.b32.xlu0 %v947, 12
      %v1130 = vpop.permute.xlu0 %1129
      %1131 = vrot.lane.b32.xlu0 %v948, 12
      %v1132 = vpop.permute.xlu0 %1131
      %1133 = vrot.lane.b32.xlu0 %v949, 12
      %v1134 = vpop.permute.xlu0 %1133
      %1135 = vrot.lane.b32.xlu0 %v950, 12
      %v1136 = vpop.permute.xlu0 %1135
      %1137 = vrot.lane.b32.xlu0 %v951, 12
      %v1138 = vpop.permute.xlu0 %1137
      %1139 = vrot.lane.b32.xlu0 %v952, 12
      %v1140 = vpop.permute.xlu0 %1139
      %1141 = vrot.lane.b32.xlu0 %v953, 12
      %v1142 = vpop.permute.xlu0 %1141
      %1143 = vrot.lane.b32.xlu0 %v954, 12
      %v1144 = vpop.permute.xlu0 %1143
      %1145 = vrot.lane.b32.xlu0 %v955, 12
      %v1146 = vpop.permute.xlu0 %1145
      %1147 = vrot.lane.b32.xlu0 %v956, 12
      %v1148 = vpop.permute.xlu0 %1147
      %1149 = vrot.lane.b32.xlu0 %v957, 12
      %v1150 = vpop.permute.xlu0 %1149
      %1151 = vrot.lane.b32.xlu0 %v1120, 12
      %v1152 = vpop.permute.xlu0 %1151
      %v1153 = vunpack.c.l.b16 %v855
      %v1154 = vunpack.c.l.b16 %v865
      %v1155 = vpack.c.b16 %v1154, %v1153
      %1156 = vrot.lane.b32.xlu0 %v991, 16
      %v1157 = vpop.permute.xlu0 %1156
      %1158 = vrot.lane.b32.xlu0 %v992, 16
      %v1159 = vpop.permute.xlu0 %1158
      %1160 = vrot.lane.b32.xlu0 %v993, 16
      %v1161 = vpop.permute.xlu0 %1160
      %1162 = vrot.lane.b32.xlu0 %v994, 16
      %v1163 = vpop.permute.xlu0 %1162
      %1164 = vrot.lane.b32.xlu0 %v995, 16
      %v1165 = vpop.permute.xlu0 %1164
      %1166 = vrot.lane.b32.xlu0 %v996, 16
      %v1167 = vpop.permute.xlu0 %1166
      %1168 = vrot.lane.b32.xlu0 %v997, 16
      %v1169 = vpop.permute.xlu0 %1168
      %1170 = vrot.lane.b32.xlu0 %v998, 16
      %v1171 = vpop.permute.xlu0 %1170
      %1172 = vrot.lane.b32.xlu0 %v999, 16
      %v1173 = vpop.permute.xlu0 %1172
      %1174 = vrot.lane.b32.xlu0 %v1000, 16
      %v1175 = vpop.permute.xlu0 %1174
      %1176 = vrot.lane.b32.xlu0 %v1001, 16
      %v1177 = vpop.permute.xlu0 %1176
      %1178 = vrot.lane.b32.xlu0 %v1002, 16
      %v1179 = vpop.permute.xlu0 %1178
      %1180 = vrot.lane.b32.xlu0 %v1003, 16
      %v1181 = vpop.permute.xlu0 %1180
      %1182 = vrot.lane.b32.xlu0 %v1004, 16
      %v1183 = vpop.permute.xlu0 %1182
      %1184 = vrot.lane.b32.xlu0 %v1005, 16
      %v1185 = vpop.permute.xlu0 %1184
      %1186 = vrot.lane.b32.xlu0 %v1155, 16
      %v1187 = vpop.permute.xlu0 %1186
      %v1188 = vunpack.c.l.b16 %v872
      %v1189 = vunpack.c.l.b16 %v875
      %v1190 = vpack.c.b16 %v1189, %v1188
      %1191 = vrot.lane.b32.xlu0 %v1071, 20
      %v1192 = vpop.permute.xlu0 %1191
      %1193 = vrot.lane.b32.xlu0 %v1072, 20
      %v1194 = vpop.permute.xlu0 %1193
      %1195 = vrot.lane.b32.xlu0 %v1073, 20
      %v1196 = vpop.permute.xlu0 %1195
      %1197 = vrot.lane.b32.xlu0 %v1074, 20
      %v1198 = vpop.permute.xlu0 %1197
      %1199 = vrot.lane.b32.xlu0 %v1075, 20
      %v1200 = vpop.permute.xlu0 %1199
      %1201 = vrot.lane.b32.xlu0 %v1076, 20
      %v1202 = vpop.permute.xlu0 %1201
      %1203 = vrot.lane.b32.xlu0 %v1077, 20
      %v1204 = vpop.permute.xlu0 %1203
      %1205 = vrot.lane.b32.xlu0 %v1078, 20
      %v1206 = vpop.permute.xlu0 %1205
      %1207 = vrot.lane.b32.xlu0 %v1079, 20
      %v1208 = vpop.permute.xlu0 %1207
      %1209 = vrot.lane.b32.xlu0 %v1080, 20
      %v1210 = vpop.permute.xlu0 %1209
      %1211 = vrot.lane.b32.xlu0 %v1081, 20
      %v1212 = vpop.permute.xlu0 %1211
      %1213 = vrot.lane.b32.xlu0 %v1082, 20
      %v1214 = vpop.permute.xlu0 %1213
      %1215 = vrot.lane.b32.xlu0 %v1083, 20
      %v1216 = vpop.permute.xlu0 %1215
      %1217 = vrot.lane.b32.xlu0 %v1084, 20
      %v1218 = vpop.permute.xlu0 %1217
      %1219 = vrot.lane.b32.xlu0 %v1085, 20
      %v1220 = vpop.permute.xlu0 %1219
      %1221 = vrot.lane.b32.xlu0 %v1190, 20
      %v1222 = vpop.permute.xlu0 %1221
      %v1223 = vunpack.c.l.b16 %v289
      %v1224 = vunpack.c.l.b16 %v290
      %v1225 = vpack.c.b16 %v1224, %v1223
      %1226 = vrot.lane.b32.xlu0 %v944, 24
      %v1227 = vpop.permute.xlu0 %1226
      %1228 = vrot.lane.b32.xlu0 %v945, 24
      %v1229 = vpop.permute.xlu0 %1228
      %1230 = vrot.lane.b32.xlu0 %v946, 24
      %v1231 = vpop.permute.xlu0 %1230
      %1232 = vrot.lane.b32.xlu0 %v947, 24
      %v1233 = vpop.permute.xlu0 %1232
      %1234 = vrot.lane.b32.xlu0 %v948, 24
      %v1235 = vpop.permute.xlu0 %1234
      %1236 = vrot.lane.b32.xlu0 %v949, 24
      %v1237 = vpop.permute.xlu0 %1236
      %1238 = vrot.lane.b32.xlu0 %v950, 24
      %v1239 = vpop.permute.xlu0 %1238
      %1240 = vrot.lane.b32.xlu0 %v951, 24
      %v1241 = vpop.permute.xlu0 %1240
      %1242 = vrot.lane.b32.xlu0 %v952, 24
      %v1243 = vpop.permute.xlu0 %1242
      %1244 = vrot.lane.b32.xlu0 %v953, 24
      %v1245 = vpop.permute.xlu0 %1244
      %1246 = vrot.lane.b32.xlu0 %v954, 24
      %v1247 = vpop.permute.xlu0 %1246
      %1248 = vrot.lane.b32.xlu0 %v955, 24
      %v1249 = vpop.permute.xlu0 %1248
      %1250 = vrot.lane.b32.xlu0 %v956, 24
      %v1251 = vpop.permute.xlu0 %1250
      %1252 = vrot.lane.b32.xlu0 %v957, 24
      %v1253 = vpop.permute.xlu0 %1252
      %1254 = vrot.lane.b32.xlu0 %v1120, 24
      %v1255 = vpop.permute.xlu0 %1254
      %1256 = vrot.lane.b32.xlu0 %v1225, 24
      %v1257 = vpop.permute.xlu0 %1256
      %v1258 = vunpack.c.l.b16 %v889
      %v1259 = vunpack.c.l.b16 %v899
      %v1260 = vpack.c.b16 %v1259, %v1258
      %1261 = vrot.lane.b32.xlu0 %v992, 28
      %v1262 = vpop.permute.xlu0 %1261
      %1263 = vrot.lane.b32.xlu0 %v993, 28
      %v1264 = vpop.permute.xlu0 %1263
      %1265 = vrot.lane.b32.xlu0 %v994, 28
      %v1266 = vpop.permute.xlu0 %1265
      %1267 = vrot.lane.b32.xlu0 %v995, 28
      %v1268 = vpop.permute.xlu0 %1267
      %1269 = vrot.lane.b32.xlu0 %v996, 28
      %v1270 = vpop.permute.xlu0 %1269
      %1271 = vrot.lane.b32.xlu0 %v997, 28
      %v1272 = vpop.permute.xlu0 %1271
      %1273 = vrot.lane.b32.xlu0 %v998, 28
      %v1274 = vpop.permute.xlu0 %1273
      %1275 = vrot.lane.b32.xlu0 %v999, 28
      %v1276 = vpop.permute.xlu0 %1275
      %1277 = vrot.lane.b32.xlu0 %v1000, 28
      %v1278 = vpop.permute.xlu0 %1277
      %1279 = vrot.lane.b32.xlu0 %v1001, 28
      %v1280 = vpop.permute.xlu0 %1279
      %1281 = vrot.lane.b32.xlu0 %v1002, 28
      %v1282 = vpop.permute.xlu0 %1281
      %1283 = vrot.lane.b32.xlu0 %v1003, 28
      %v1284 = vpop.permute.xlu0 %1283
      %1285 = vrot.lane.b32.xlu0 %v1004, 28
      %v1286 = vpop.permute.xlu0 %1285
      %1287 = vrot.lane.b32.xlu0 %v1005, 28
      %v1288 = vpop.permute.xlu0 %1287
      %1289 = vrot.lane.b32.xlu0 %v1155, 28
      %v1290 = vpop.permute.xlu0 %1289
      %1291 = vrot.lane.b32.xlu0 %v1260, 28
      %v1292 = vpop.permute.xlu0 %1291
      %v1293 = vunpack.c.l.b16 %v906
      %v1294 = vunpack.c.l.b16 %v909
      %v1295 = vpack.c.b16 %v1294, %v1293
      %1296 = vrot.lane.b32.xlu0 %v1072, 32
      %v1297 = vpop.permute.xlu0 %1296
      %1298 = vrot.lane.b32.xlu0 %v1073, 32
      %v1299 = vpop.permute.xlu0 %1298
      %1300 = vrot.lane.b32.xlu0 %v1074, 32
      %v1301 = vpop.permute.xlu0 %1300
      %1302 = vrot.lane.b32.xlu0 %v1075, 32
      %v1303 = vpop.permute.xlu0 %1302
      %1304 = vrot.lane.b32.xlu0 %v1076, 32
      %v1305 = vpop.permute.xlu0 %1304
      %1306 = vrot.lane.b32.xlu0 %v1077, 32
      %v1307 = vpop.permute.xlu0 %1306
      %1308 = vrot.lane.b32.xlu0 %v1078, 32
      %v1309 = vpop.permute.xlu0 %1308
      %1310 = vrot.lane.b32.xlu0 %v1079, 32
      %v1311 = vpop.permute.xlu0 %1310
      %1312 = vrot.lane.b32.xlu0 %v1080, 32
      %v1313 = vpop.permute.xlu0 %1312
      %1314 = vrot.lane.b32.xlu0 %v1081, 32
      %v1315 = vpop.permute.xlu0 %1314
      %1316 = vrot.lane.b32.xlu0 %v1082, 32
      %v1317 = vpop.permute.xlu0 %1316
      %1318 = vrot.lane.b32.xlu0 %v1083, 32
      %v1319 = vpop.permute.xlu0 %1318
      %1320 = vrot.lane.b32.xlu0 %v1084, 32
      %v1321 = vpop.permute.xlu0 %1320
      %1322 = vrot.lane.b32.xlu0 %v1085, 32
      %v1323 = vpop.permute.xlu0 %1322
      %1324 = vrot.lane.b32.xlu0 %v1190, 32
      %v1325 = vpop.permute.xlu0 %1324
      %1326 = vrot.lane.b32.xlu0 %v1295, 32
      %v1327 = vpop.permute.xlu0 %1326
      %vm1328 = vcmask 31744
      %v1331 = vsel %vm1328, %v942, %v1007
      %v1334 = vsel %vm1328, %v943, %v1009
      %v1337 = vsel %vm1328, %v944, %v1011
      %v1340 = vsel %vm1328, %v945, %v1013
      %v1343 = vsel %vm1328, %v946, %v1015
      %v1346 = vsel %vm1328, %v947, %v1017
      %v1349 = vsel %vm1328, %v948, %v1019
      %v1352 = vsel %vm1328, %v949, %v1021
      %v1355 = vsel %vm1328, %v950, %v1023
      %v1358 = vsel %vm1328, %v951, %v1025
      %v1361 = vsel %vm1328, %v952, %v1027
      %v1364 = vsel %vm1328, %v953, %v1029
      %v1367 = vsel %vm1328, %v954, %v1031
      %v1370 = vsel %vm1328, %v955, %v1033
      %v1373 = vsel %vm1328, %v956, %v1035
      %v1376 = vsel %vm1328, %v957, %v1037
      %vm1377 = vcmask 64512
      %v1379 = vsel %vm1377, %v1331, %v1087
      %v1381 = vsel %vm1377, %v1334, %v1089
      %v1383 = vsel %vm1377, %v1337, %v1091
      %v1385 = vsel %vm1377, %v1340, %v1093
      %v1387 = vsel %vm1377, %v1343, %v1095
      %v1389 = vsel %vm1377, %v1346, %v1097
      %v1391 = vsel %vm1377, %v1349, %v1099
      %v1393 = vsel %vm1377, %v1352, %v1101
      %v1395 = vsel %vm1377, %v1355, %v1103
      %v1397 = vsel %vm1377, %v1358, %v1105
      %v1399 = vsel %vm1377, %v1361, %v1107
      %v1401 = vsel %vm1377, %v1364, %v1109
      %v1403 = vsel %vm1377, %v1367, %v1111
      %v1405 = vsel %vm1377, %v1370, %v1113
      %v1407 = vsel %vm1377, %v1373, %v1115
      %v1409 = vsel %vm1377, %v1376, %v1117
      %vm1410 = vcmask 97280
      %v1412 = vsel %vm1410, %v1379, %v1122
      %v1414 = vsel %vm1410, %v1381, %v1124
      %v1416 = vsel %vm1410, %v1383, %v1126
      %v1418 = vsel %vm1410, %v1385, %v1128
      %v1420 = vsel %vm1410, %v1387, %v1130
      %v1422 = vsel %vm1410, %v1389, %v1132
      %v1424 = vsel %vm1410, %v1391, %v1134
      %v1426 = vsel %vm1410, %v1393, %v1136
      %v1428 = vsel %vm1410, %v1395, %v1138
      %v1430 = vsel %vm1410, %v1397, %v1140
      %v1432 = vsel %vm1410, %v1399, %v1142
      %v1434 = vsel %vm1410, %v1401, %v1144
      %v1436 = vsel %vm1410, %v1403, %v1146
      %v1438 = vsel %vm1410, %v1405, %v1148
      %v1440 = vsel %vm1410, %v1407, %v1150
      %v1442 = vsel %vm1410, %v1409, %v1152
      %vm1443 = vcmask 130048
      %v1445 = vsel %vm1443, %v1412, %v1157
      %v1447 = vsel %vm1443, %v1414, %v1159
      %v1449 = vsel %vm1443, %v1416, %v1161
      %v1451 = vsel %vm1443, %v1418, %v1163
      %v1453 = vsel %vm1443, %v1420, %v1165
      %v1455 = vsel %vm1443, %v1422, %v1167
      %v1457 = vsel %vm1443, %v1424, %v1169
      %v1459 = vsel %vm1443, %v1426, %v1171
      %v1461 = vsel %vm1443, %v1428, %v1173
      %v1463 = vsel %vm1443, %v1430, %v1175
      %v1465 = vsel %vm1443, %v1432, %v1177
      %v1467 = vsel %vm1443, %v1434, %v1179
      %v1469 = vsel %vm1443, %v1436, %v1181
      %v1471 = vsel %vm1443, %v1438, %v1183
      %v1473 = vsel %vm1443, %v1440, %v1185
      %v1475 = vsel %vm1443, %v1442, %v1187
      %vm1476 = vcmask 162816
      %v1478 = vsel %vm1476, %v1445, %v1192
      %v1480 = vsel %vm1476, %v1447, %v1194
      %v1482 = vsel %vm1476, %v1449, %v1196
      %v1484 = vsel %vm1476, %v1451, %v1198
      %v1486 = vsel %vm1476, %v1453, %v1200
      %v1488 = vsel %vm1476, %v1455, %v1202
      %v1490 = vsel %vm1476, %v1457, %v1204
      %v1492 = vsel %vm1476, %v1459, %v1206
      %v1494 = vsel %vm1476, %v1461, %v1208
      %v1496 = vsel %vm1476, %v1463, %v1210
      %v1498 = vsel %vm1476, %v1465, %v1212
      %v1500 = vsel %vm1476, %v1467, %v1214
      %v1502 = vsel %vm1476, %v1469, %v1216
      %v1504 = vsel %vm1476, %v1471, %v1218
      %v1506 = vsel %vm1476, %v1473, %v1220
      %v1508 = vsel %vm1476, %v1475, %v1222
      %vm1509 = vcmask 195584
      %v1511 = vsel %vm1509, %v1478, %v1227
      %v1513 = vsel %vm1509, %v1480, %v1229
      %v1515 = vsel %vm1509, %v1482, %v1231
      %v1517 = vsel %vm1509, %v1484, %v1233
      %v1519 = vsel %vm1509, %v1486, %v1235
      %v1521 = vsel %vm1509, %v1488, %v1237
      %v1523 = vsel %vm1509, %v1490, %v1239
      %v1525 = vsel %vm1509, %v1492, %v1241
      %v1527 = vsel %vm1509, %v1494, %v1243
      %v1529 = vsel %vm1509, %v1496, %v1245
      %v1531 = vsel %vm1509, %v1498, %v1247
      %v1533 = vsel %vm1509, %v1500, %v1249
      %v1535 = vsel %vm1509, %v1502, %v1251
      %v1537 = vsel %vm1509, %v1504, %v1253
      %v1539 = vsel %vm1509, %v1506, %v1255
      %v1541 = vsel %vm1509, %v1508, %v1257
      %vm1542 = vcmask 228352
      %v1544 = vsel %vm1542, %v1511, %v1262
      %v1546 = vsel %vm1542, %v1513, %v1264
      %v1548 = vsel %vm1542, %v1515, %v1266
      %v1550 = vsel %vm1542, %v1517, %v1268
      %v1552 = vsel %vm1542, %v1519, %v1270
      %v1554 = vsel %vm1542, %v1521, %v1272
      %v1556 = vsel %vm1542, %v1523, %v1274
      %v1558 = vsel %vm1542, %v1525, %v1276
      %v1560 = vsel %vm1542, %v1527, %v1278
      %v1562 = vsel %vm1542, %v1529, %v1280
      %v1564 = vsel %vm1542, %v1531, %v1282
      %v1566 = vsel %vm1542, %v1533, %v1284
      %v1568 = vsel %vm1542, %v1535, %v1286
      %v1570 = vsel %vm1542, %v1537, %v1288
      %v1572 = vsel %vm1542, %v1539, %v1290
      %v1574 = vsel %vm1542, %v1541, %v1292
      %vm1575 = vcmask 261120
      %v1577 = vsel %vm1575, %v1544, %v1297
      %v1579 = vsel %vm1575, %v1546, %v1299
      %v1581 = vsel %vm1575, %v1548, %v1301
      %v1583 = vsel %vm1575, %v1550, %v1303
      %v1585 = vsel %vm1575, %v1552, %v1305
      %v1587 = vsel %vm1575, %v1554, %v1307
      %v1589 = vsel %vm1575, %v1556, %v1309
      %v1591 = vsel %vm1575, %v1558, %v1311
      %v1593 = vsel %vm1575, %v1560, %v1313
      %v1595 = vsel %vm1575, %v1562, %v1315
      %v1597 = vsel %vm1575, %v1564, %v1317
      %v1599 = vsel %vm1575, %v1566, %v1319
      %v1601 = vsel %vm1575, %v1568, %v1321
      %v1603 = vsel %vm1575, %v1570, %v1323
      %v1605 = vsel %vm1575, %v1572, %v1325
      %v1607 = vsel %vm1575, %v1574, %v1327
      %v1608 = vld [vmem:[%s1] sm:$0xf]
      %v1609 = vld [vmem:[%s1 + $0x4] sm:$0xf]
      %v1610 = vld [vmem:[%s1 + $0x8] sm:$0xf]
      %v1611 = vld [vmem:[%s1 + $0xc] sm:$0xf]
      %v1612 = vld [vmem:[%s1 + $0x10] sm:$0x3]
      %v1613 = vld [vmem:[%s2] sm:$0x1]
      %v1615 = vlaneseq
      %v1616 = vshrl.u32 %v1615, 7
      %v1617 = vsub.s32 0, %v1616
      %v1618 = vrot.slane %v1613, %v1617
      %v1625 = vunpack.c.l.b16 %v1608
      %v1626 = vunpack.c.l.b16 %v1609
      %v1627 = vunpack.c.l.b16 %v1610
      %v1628 = vunpack.c.l.b16 %v1611
      %v1629 = vunpack.c.l.b16 %v1612
      %v1630 = vpack.c.b16 %v1626, %v1625
      %v1631 = vpack.c.b16 %v1628, %v1627
      %v1632 = vpack.c.b16 %v1629, %v1629
      %vm1635 = vcmask 293888
      %v1636 = vsel %vm1635, %v1577, 0
      %v1638 = vsel %vm1635, %v1579, 0
      %v1640 = vsel %vm1635, %v1581, 0
      %v1642 = vsel %vm1635, %v1583, 0
      %v1644 = vsel %vm1635, %v1585, 0
      %v1646 = vsel %vm1635, %v1587, 0
      %v1648 = vsel %vm1635, %v1589, 0
      %v1650 = vsel %vm1635, %v1591, 0
      %v1652 = vsel %vm1635, %v1593, 0
      %v1654 = vsel %vm1635, %v1595, 0
      %v1656 = vsel %vm1635, %v1597, 0
      %v1658 = vsel %vm1635, %v1599, 0
      %v1660 = vsel %vm1635, %v1601, 0
      %v1662 = vsel %vm1635, %v1603, 0
      %v1664 = vsel %vm1635, %v1605, 0
      %v1666 = vsel %vm1635, %v1607, 0
      %vm1668 = vcmask 1041408
      %v1670 = vsel %vm1668, %v1632, 0
      %1672 = vmatprep.subr.bf16.mxu0 0
      %1673 = vmatpush1.bf16.msra.mxu0 %v1630
      %1674 = vmatprep.subr.bf16.mxu0 0
      %1675 = vmatpush1.bf16.msra.mxu0 %v1631
      %1676 = vmatprep.subr.bf16.mxu0 0
      %1677 = vmatpush1.bf16.msra.mxu0 %v1670
      %1678 = vmatprep.subr.bf16.mxu0 0
      %1679 = vmatpush1.bf16.msra.mxu0 0
      %1680 = vmatprep.subr.bf16.mxu0 0
      %1681 = vmatpush1.bf16.msra.mxu0 0
      %1682 = vmatprep.subr.bf16.mxu0 0
      %1683 = vmatpush1.bf16.msra.mxu0 0
      %1684 = vmatprep.subr.bf16.mxu0 0
      %1685 = vmatpush1.bf16.msra.mxu0 0
      %1686 = vmatprep.subr.bf16.mxu0 0
      %1687 = vmatpush1.bf16.msra.mxu0 0
      %1688 = vmatprep.subr.bf16.mxu0 0
      %1689 = vmatpush1.bf16.msra.mxu0 0
      %1690 = vmatprep.subr.bf16.mxu0 0
      %1691 = vmatpush1.bf16.msra.mxu0 0
      %1692 = vmatprep.subr.bf16.mxu0 0
      %1693 = vmatpush1.bf16.msra.mxu0 0
      %1694 = vmatprep.subr.bf16.mxu0 0
      %1695 = vmatpush1.bf16.msra.mxu0 0
      %1696 = vmatprep.subr.bf16.mxu0 0
      %1697 = vmatpush1.bf16.msra.mxu0 0
      %1698 = vmatprep.subr.bf16.mxu0 0
      %1699 = vmatpush1.bf16.msra.mxu0 0
      %1700 = vmatprep.subr.bf16.mxu0 0
      %1701 = vmatpush1.bf16.msra.mxu0 0
      %1702 = vmatprep.subr.bf16.mxu0 0
      %1703 = vmatpush1.bf16.msra.mxu0 0
      %1704 = vmatprep.mubr.bf16.mxu0 0
      %1705 = vmatmul.mubr.bf16.gmra.mrb[0].mxu0 %v1636
      %v1706 = vpop.f32.mrb[0].mxu0
      %v1707 = vadd.f32 %v1618, %v1706
      %v1708 = vpop.f32.mrb[0].mxu0
      %v1709 = vpop.f32.mrb[0].mxu0
      %v1710 = vadd.f32 %v1618, %v1709
      %v1711 = vpop.f32.mrb[0].mxu0
      %1712 = vmatprep.mubr.bf16.mxu0 0
      %1713 = vmatmul.mubr.bf16.gmra.mrb[0].mxu0 %v1638
      %v1714 = vpop.f32.mrb[0].mxu0
      %v1715 = vadd.f32 %v1618, %v1714
      %v1716 = vpop.f32.mrb[0].mxu0
      %v1717 = vpop.f32.mrb[0].mxu0
      %v1718 = vadd.f32 %v1618, %v1717
      %v1719 = vpop.f32.mrb[0].mxu0
      %1720 = vmatprep.mubr.bf16.mxu0 0
      %1721 = vmatmul.mubr.bf16.gmra.mrb[0].mxu0 %v1640
      %v1722 = vpop.f32.mrb[0].mxu0
      %v1723 = vadd.f32 %v1618, %v1722
      %v1724 = vpop.f32.mrb[0].mxu0
      %v1725 = vpop.f32.mrb[0].mxu0
      %v1726 = vadd.f32 %v1618, %v1725
      %v1727 = vpop.f32.mrb[0].mxu0
      %1728 = vmatprep.mubr.bf16.mxu0 0
      %1729 = vmatmul.mubr.bf16.gmra.mrb[0].mxu0 %v1642
      %v1730 = vpop.f32.mrb[0].mxu0
      %v1731 = vadd.f32 %v1618, %v1730
      %v1732 = vpop.f32.mrb[0].mxu0
      %v1733 = vpop.f32.mrb[0].mxu0
      %v1734 = vadd.f32 %v1618, %v1733
      %v1735 = vpop.f32.mrb[0].mxu0
      %1736 = vmatprep.mubr.bf16.mxu0 0
      %1737 = vmatmul.mubr.bf16.gmra.mrb[0].mxu0 %v1644
      %v1738 = vpop.f32.mrb[0].mxu0
      %v1739 = vadd.f32 %v1618, %v1738
      %v1740 = vpop.f32.mrb[0].mxu0
      %v1741 = vpop.f32.mrb[0].mxu0
      %v1742 = vadd.f32 %v1618, %v1741
      %v1743 = vpop.f32.mrb[0].mxu0
      %1744 = vmatprep.mubr.bf16.mxu0 0
      %1745 = vmatmul.mubr.bf16.gmra.mrb[0].mxu0 %v1646
      %v1746 = vpop.f32.mrb[0].mxu0
      %v1747 = vadd.f32 %v1618, %v1746
      %v1748 = vpop.f32.mrb[0].mxu0
      %v1749 = vpop.f32.mrb[0].mxu0
      %v1750 = vadd.f32 %v1618, %v1749
      %v1751 = vpop.f32.mrb[0].mxu0
      %1752 = vmatprep.mubr.bf16.mxu0 0
      %1753 = vmatmul.mubr.bf16.gmra.mrb[0].mxu0 %v1648
      %v1754 = vpop.f32.mrb[0].mxu0
      %v1755 = vadd.f32 %v1618, %v1754
      %v1756 = vpop.f32.mrb[0].mxu0
      %v1757 = vpop.f32.mrb[0].mxu0
      %v1758 = vadd.f32 %v1618, %v1757
      %v1759 = vpop.f32.mrb[0].mxu0
      %1760 = vmatprep.mubr.bf16.mxu0 0
      %1761 = vmatmul.mubr.bf16.gmra.mrb[0].mxu0 %v1650
      %v1762 = vpop.f32.mrb[0].mxu0
      %v1763 = vadd.f32 %v1618, %v1762
      %v1764 = vpop.f32.mrb[0].mxu0
      %v1765 = vpop.f32.mrb[0].mxu0
      %v1766 = vadd.f32 %v1618, %v1765
      %v1767 = vpop.f32.mrb[0].mxu0
      %1768 = vmatprep.mubr.bf16.mxu0 0
      %1769 = vmatmul.mubr.bf16.gmra.mrb[0].mxu0 %v1652
      %v1770 = vpop.f32.mrb[0].mxu0
      %v1771 = vadd.f32 %v1618, %v1770
      %v1772 = vpop.f32.mrb[0].mxu0
      %v1773 = vpop.f32.mrb[0].mxu0
      %v1774 = vadd.f32 %v1618, %v1773
      %v1775 = vpop.f32.mrb[0].mxu0
      %1776 = vmatprep.mubr.bf16.mxu0 0
      %1777 = vmatmul.mubr.bf16.gmra.mrb[0].mxu0 %v1654
      %v1778 = vpop.f32.mrb[0].mxu0
      %v1779 = vadd.f32 %v1618, %v1778
      %v1780 = vpop.f32.mrb[0].mxu0
      %v1781 = vpop.f32.mrb[0].mxu0
      %v1782 = vadd.f32 %v1618, %v1781
      %v1783 = vpop.f32.mrb[0].mxu0
      %1784 = vmatprep.mubr.bf16.mxu0 0
      %1785 = vmatmul.mubr.bf16.gmra.mrb[0].mxu0 %v1656
      %v1786 = vpop.f32.mrb[0].mxu0
      %v1787 = vadd.f32 %v1618, %v1786
      %v1788 = vpop.f32.mrb[0].mxu0
      %v1789 = vpop.f32.mrb[0].mxu0
      %v1790 = vadd.f32 %v1618, %v1789
      %v1791 = vpop.f32.mrb[0].mxu0
      %1792 = vmatprep.mubr.bf16.mxu0 0
      %1793 = vmatmul.mubr.bf16.gmra.mrb[0].mxu0 %v1658
      %v1794 = vpop.f32.mrb[0].mxu0
      %v1795 = vadd.f32 %v1618, %v1794
      %v1796 = vpop.f32.mrb[0].mxu0
      %v1797 = vpop.f32.mrb[0].mxu0
      %v1798 = vadd.f32 %v1618, %v1797
      %v1799 = vpop.f32.mrb[0].mxu0
      %1800 = vmatprep.mubr.bf16.mxu0 0
      %1801 = vmatmul.mubr.bf16.gmra.mrb[0].mxu0 %v1660
      %v1802 = vpop.f32.mrb[0].mxu0
      %v1803 = vadd.f32 %v1618, %v1802
      %v1804 = vpop.f32.mrb[0].mxu0
      %v1805 = vpop.f32.mrb[0].mxu0
      %v1806 = vadd.f32 %v1618, %v1805
      %v1807 = vpop.f32.mrb[0].mxu0
      %1808 = vmatprep.mubr.bf16.mxu0 0
      %1809 = vmatmul.mubr.bf16.gmra.mrb[0].mxu0 %v1662
      %v1810 = vpop.f32.mrb[0].mxu0
      %v1811 = vadd.f32 %v1618, %v1810
      %v1812 = vpop.f32.mrb[0].mxu0
      %v1813 = vpop.f32.mrb[0].mxu0
      %v1814 = vadd.f32 %v1618, %v1813
      %v1815 = vpop.f32.mrb[0].mxu0
      %1816 = vmatprep.mubr.bf16.mxu0 0
      %1817 = vmatmul.mubr.bf16.gmra.mrb[0].mxu0 %v1664
      %v1818 = vpop.f32.mrb[0].mxu0
      %v1819 = vadd.f32 %v1618, %v1818
      %v1820 = vpop.f32.mrb[0].mxu0
      %v1821 = vpop.f32.mrb[0].mxu0
      %v1822 = vadd.f32 %v1618, %v1821
      %v1823 = vpop.f32.mrb[0].mxu0
      %1824 = vmatprep.mubr.bf16.mxu0 0
      %1825 = vmatmul.mubr.bf16.gmra.mrb[0].mxu0 %v1666
      %v1826 = vpop.f32.mrb[0].mxu0
      %v1827 = vadd.f32 %v1618, %v1826
      %v1828 = vpop.f32.mrb[0].mxu0
      %v1829 = vpop.f32.mrb[0].mxu0
      %v1830 = vadd.f32 %v1618, %v1829
      %v1831 = vpop.f32.mrb[0].mxu0
      %1832 = vdwg.mxu0
      %v1833 = vmax.f32 %v1707, 0.0
      %v1834 = vmax.f32 %v1710, 0.0
      %v1835 = vmax.f32 %v1715, 0.0
      %v1836 = vmax.f32 %v1718, 0.0
      %v1837 = vmax.f32 %v1723, 0.0
      %v1838 = vmax.f32 %v1726, 0.0
      %v1839 = vmax.f32 %v1731, 0.0
      %v1840 = vmax.f32 %v1734, 0.0
      %v1841 = vmax.f32 %v1739, 0.0
      %v1842 = vmax.f32 %v1742, 0.0
      %v1843 = vmax.f32 %v1747, 0.0
      %v1844 = vmax.f32 %v1750, 0.0
      %v1845 = vmax.f32 %v1755, 0.0
      %v1846 = vmax.f32 %v1758, 0.0
      %v1847 = vmax.f32 %v1763, 0.0
      %v1848 = vmax.f32 %v1766, 0.0
      %v1849 = vmax.f32 %v1771, 0.0
      %v1850 = vmax.f32 %v1774, 0.0
      %v1851 = vmax.f32 %v1779, 0.0
      %v1852 = vmax.f32 %v1782, 0.0
      %v1853 = vmax.f32 %v1787, 0.0
      %v1854 = vmax.f32 %v1790, 0.0
      %v1855 = vmax.f32 %v1795, 0.0
      %v1856 = vmax.f32 %v1798, 0.0
      %v1857 = vmax.f32 %v1803, 0.0
      %v1858 = vmax.f32 %v1806, 0.0
      %v1859 = vmax.f32 %v1811, 0.0
      %v1860 = vmax.f32 %v1814, 0.0
      %v1861 = vmax.f32 %v1819, 0.0
      %v1862 = vmax.f32 %v1822, 0.0
      %v1863 = vmax.f32 %v1827, 0.0
      %v1864 = vmax.f32 %v1830, 0.0
      %v1865 = vpack.c.bf16 %v1834, %v1833
      %v1866 = vpack.c.bf16 %v1836, %v1835
      %v1867 = vpack.c.bf16 %v1838, %v1837
      %v1868 = vpack.c.bf16 %v1840, %v1839
      %v1869 = vpack.c.bf16 %v1842, %v1841
      %v1870 = vpack.c.bf16 %v1844, %v1843
      %v1871 = vpack.c.bf16 %v1846, %v1845
      %v1872 = vpack.c.bf16 %v1848, %v1847
      %v1873 = vpack.c.bf16 %v1850, %v1849
      %v1874 = vpack.c.bf16 %v1852, %v1851
      %v1875 = vpack.c.bf16 %v1854, %v1853
      %v1876 = vpack.c.bf16 %v1856, %v1855
      %v1877 = vpack.c.bf16 %v1858, %v1857
      %v1878 = vpack.c.bf16 %v1860, %v1859
      %v1879 = vpack.c.bf16 %v1862, %v1861
      %v1880 = vpack.c.bf16 %v1864, %v1863
      %v1897 = vunpack.c.l.b16 %v1865
      %v1898 = vunpack.c.h.b16 %v1865
      %v1899 = vunpack.c.l.b16 %v1866
      %v1900 = vunpack.c.h.b16 %v1866
      %v1901 = vunpack.c.l.b16 %v1867
      %v1902 = vunpack.c.h.b16 %v1867
      %v1903 = vunpack.c.l.b16 %v1868
      %v1904 = vunpack.c.h.b16 %v1868
      %v1905 = vunpack.c.l.b16 %v1869
      %v1906 = vunpack.c.h.b16 %v1869
      %v1907 = vunpack.c.l.b16 %v1870
      %v1908 = vunpack.c.h.b16 %v1870
      %v1909 = vunpack.c.l.b16 %v1871
      %v1910 = vunpack.c.h.b16 %v1871
      %v1911 = vunpack.c.l.b16 %v1872
      %v1912 = vunpack.c.h.b16 %v1872
      %v1913 = vunpack.c.l.b16 %v1873
      %v1914 = vunpack.c.h.b16 %v1873
      %v1915 = vunpack.c.l.b16 %v1874
      %v1916 = vunpack.c.h.b16 %v1874
      %v1917 = vunpack.c.l.b16 %v1875
      %v1918 = vunpack.c.h.b16 %v1875
      %v1919 = vunpack.c.l.b16 %v1876
      %v1920 = vunpack.c.h.b16 %v1876
      %v1921 = vunpack.c.l.b16 %v1877
      %v1922 = vunpack.c.h.b16 %v1877
      %v1923 = vunpack.c.l.b16 %v1878
      %v1924 = vunpack.c.h.b16 %v1878
      %v1925 = vunpack.c.l.b16 %v1879
      %v1926 = vunpack.c.h.b16 %v1879
      %v1927 = vunpack.c.l.b16 %v1880
      %v1928 = vunpack.c.h.b16 %v1880
      %v1929 = vpack.c.b16 %v1897, %v1897
      %v1930 = vpack.c.b16 %v1898, %v1898
      %v1931 = vpack.c.b16 %v1899, %v1899
      %v1932 = vpack.c.b16 %v1900, %v1900
      %v1933 = vpack.c.b16 %v1901, %v1901
      %v1934 = vpack.c.b16 %v1902, %v1902
      %v1935 = vpack.c.b16 %v1903, %v1903
      %v1936 = vpack.c.b16 %v1904, %v1904
      %v1937 = vpack.c.b16 %v1905, %v1905
      %v1938 = vpack.c.b16 %v1906, %v1906
      %v1939 = vpack.c.b16 %v1907, %v1907
      %v1940 = vpack.c.b16 %v1908, %v1908
      %v1941 = vpack.c.b16 %v1909, %v1909
      %v1942 = vpack.c.b16 %v1910, %v1910
      %v1943 = vpack.c.b16 %v1911, %v1911
      %v1944 = vpack.c.b16 %v1912, %v1912
      %v1945 = vpack.c.b16 %v1913, %v1913
      %v1946 = vpack.c.b16 %v1914, %v1914
      %v1947 = vpack.c.b16 %v1915, %v1915
      %v1948 = vpack.c.b16 %v1916, %v1916
      %v1949 = vpack.c.b16 %v1917, %v1917
      %v1950 = vpack.c.b16 %v1918, %v1918
      %v1951 = vpack.c.b16 %v1919, %v1919
      %v1952 = vpack.c.b16 %v1920, %v1920
      %v1953 = vpack.c.b16 %v1921, %v1921
      %v1954 = vpack.c.b16 %v1922, %v1922
      %v1955 = vpack.c.b16 %v1923, %v1923
      %v1956 = vpack.c.b16 %v1924, %v1924
      %v1957 = vpack.c.b16 %v1925, %v1925
      %v1958 = vpack.c.b16 %v1926, %v1926
      %v1959 = vpack.c.b16 %v1927, %v1927
      %v1960 = vpack.c.b16 %v1928, %v1928
      %vm1993 = vcmask 60416
      %1994 = vst.msk [vmem:[%s235] sm:$0xf] %vm1993, %v1929
      %1995 = vst.msk [vmem:[%s235 + $0x4] sm:$0xf] %vm1993, %v1930
      %1996 = vst.msk [vmem:[%s235 + $0x8] sm:$0xf] %vm1993, %v1931
      %1997 = vst.msk [vmem:[%s235 + $0xc] sm:$0xf] %vm1993, %v1932
      %1998 = vst.msk [vmem:[%s235 + $0x10] sm:$0xf] %vm1993, %v1933
      %1999 = vst.msk [vmem:[%s235 + $0x14] sm:$0xf] %vm1993, %v1934
      %2000 = vst.msk [vmem:[%s235 + $0x18] sm:$0xf] %vm1993, %v1935
      %2001 = vst.msk [vmem:[%s235 + $0x1c] sm:$0xf] %vm1993, %v1936
      %2002 = vst.msk [vmem:[%s235 + $0x20] sm:$0xf] %vm1993, %v1937
      %2003 = vst.msk [vmem:[%s235 + $0x24] sm:$0xf] %vm1993, %v1938
      %2004 = vst.msk [vmem:[%s235 + $0x28] sm:$0xf] %vm1993, %v1939
      %2005 = vst.msk [vmem:[%s235 + $0x2c] sm:$0xf] %vm1993, %v1940
      %2006 = vst.msk [vmem:[%s235 + $0x30] sm:$0xf] %vm1993, %v1941
      %2007 = vst.msk [vmem:[%s235 + $0x34] sm:$0xf] %vm1993, %v1942
      %2008 = vst.msk [vmem:[%s235 + $0x38] sm:$0xf] %vm1993, %v1943
      %2009 = vst.msk [vmem:[%s235 + $0x3c] sm:$0xf] %vm1993, %v1944
      %2010 = vst.msk [vmem:[%s235 + $0x40] sm:$0xf] %vm1993, %v1945
      %2011 = vst.msk [vmem:[%s235 + $0x44] sm:$0xf] %vm1993, %v1946
      %2012 = vst.msk [vmem:[%s235 + $0x48] sm:$0xf] %vm1993, %v1947
      %2013 = vst.msk [vmem:[%s235 + $0x4c] sm:$0xf] %vm1993, %v1948
      %2014 = vst.msk [vmem:[%s235 + $0x50] sm:$0xf] %vm1993, %v1949
      %2015 = vst.msk [vmem:[%s235 + $0x54] sm:$0xf] %vm1993, %v1950
      %2016 = vst.msk [vmem:[%s235 + $0x58] sm:$0xf] %vm1993, %v1951
      %2017 = vst.msk [vmem:[%s235 + $0x5c] sm:$0xf] %vm1993, %v1952
      %2018 = vst.msk [vmem:[%s235 + $0x60] sm:$0xf] %vm1993, %v1953
      %2019 = vst.msk [vmem:[%s235 + $0x64] sm:$0xf] %vm1993, %v1954
      %2020 = vst.msk [vmem:[%s235 + $0x68] sm:$0xf] %vm1993, %v1955
      %2021 = vst.msk [vmem:[%s235 + $0x6c] sm:$0xf] %vm1993, %v1956
      %2022 = vst.msk [vmem:[%s235 + $0x70] sm:$0xf] %vm1993, %v1957
      %2023 = vst.msk [vmem:[%s235 + $0x74] sm:$0xf] %vm1993, %v1958
      %2024 = vst.msk [vmem:[%s235 + $0x78] sm:$0xf] %vm1993, %v1959
      %2025 = vst.msk [vmem:[%s235 + $0x7c] sm:$0xf] %vm1993, %v1960
      %s2026 = sadd.s32 %s18, %s19
      %p2027 = scmp.lt.s32.totalorder %s2026, 1
      %s2028 = scalar_select %p2027, %s2026, 1
      %s2029 = smul.addr %s2028, 32
      %s2030 = smul.addr %s2029, 4
      %s2031 = scalar_lea.vmem %s3, %s2030
      // Predicated region
      $region33: #{conv_bn_relu.1} parent=31 // pred_check
        %p2032 = pneg %p128
      $region34: #{conv_bn_relu.1} parent=31 // pred_check_branch
        %2034 = sbr.rel (%p2032) target = $region36
      $region35: #{conv_bn_relu.1} parent=31 // pred_region
        %s2035 = sadd.s32 %s18, %s19
      $region36: #{conv_bn_relu.1} parent=31 // pred_fallthru
        _
    $region32: #{conv_bn_relu.1} parent=5 // pred_fallthru
      _
    %p2036 = scmp.le.s32.totalorder 2, %s9
    // Predicated region
    $region37: #{conv_bn_relu.1} parent=5 // pred_check
      %p2037 = pneg %p2036
    $region38: #{conv_bn_relu.1} parent=5 // pred_check_branch
      %2039 = sbr.rel (%p2037) target = $region40
    $region39: #{conv_bn_relu.1} parent=5 // pred_region
      %s2040 = ssub.s32 %s9, 2
      // Predicated region
      $region41: #{conv_bn_relu.1} parent=39 // pred_check
        %p2041 = pneg %p134
      $region42: #{conv_bn_relu.1} parent=39 // pred_check_branch
        %2043 = sbr.rel (%p2041) target = $region44
      $region43: #{conv_bn_relu.1} parent=39 // pred_region
        %s2044 = sadd.s32 %s20, %s21
        %p2045 = scmp.lt.s32.totalorder %s2044, 1
        %s2046 = scalar_select %p2045, %s2044, 1
        %s2047 = smul.addr %s2046, 32
        %s2048 = smul.addr %s2047, 4
        %s2049 = scalar_lea.vmem %s3, %s2048
      $region44: #{conv_bn_relu.1} parent=39 // pred_fallthru
        _
    $region40: #{conv_bn_relu.1} parent=5 // pred_fallthru
      _
  $region6: #{conv_bn_relu.1} parent=0 // loop_footer
    %s13 = sadd.s32 1, %s9
  $region7: #{conv_bn_relu.1} parent=0 // loop_footer_branch
    %8 = sbr.rel target = $region3
  $region8: #{conv_bn_relu.1} parent=0 // loop_exit
    _

</llo_original>
